<compile_context>
chip_gen: v5e
topology: v5e:2x2
jax: 0.10.0
libtpu: 0.0.40
codegen_flags: <defaults>
</compile_context>

<pallas_src>
import jax
import jax.numpy as jnp
from jax.experimental import pallas as pl
from jax.experimental.pallas import tpu as pltpu

HIDDEN = 512
OUT = 10
OUT_PAD = 128   # pad final output dim to a full lane width; sliced back to 10 outside
MAX_TM = 512    # batch tile (rows per grid step)


def _round_up(x, m):
    return (x + m - 1) // m * m


def mlp_kernel(x_ref, w1_ref, b1_ref, w2_ref, b2_ref, w3_ref, b3_ref, o_ref):
    # bf16 operands on the MXU, f32 accumulation, biases added in f32.
    x = x_ref[...].astype(jnp.bfloat16)   # no-op if h is already bf16

    # Layer 1: Linear(512, 512) + ReLU
    h1 = jnp.dot(x, w1_ref[...], preferred_element_type=jnp.float32) + b1_ref[...]
    h1 = jnp.maximum(h1, 0.0).astype(jnp.bfloat16)

    # Layer 2: Linear(512, 512) + ReLU
    h2 = jnp.dot(h1, w2_ref[...], preferred_element_type=jnp.float32) + b2_ref[...]
    h2 = jnp.maximum(h2, 0.0).astype(jnp.bfloat16)

    # Layer 3: Linear(512, 10) (weights zero-padded to 128 output lanes -> lane-dense store)
    out = jnp.dot(h2, w3_ref[...], preferred_element_type=jnp.float32) + b3_ref[...]
    o_ref[...] = out.astype(o_ref.dtype)   # bf16 store; upcast happens in the external slice


def label_predictor(h, params):
    """h: (B, 512) float32 or bfloat16 -> (B, 10) float32."""
    w1, b1, w2, b2, w3p, b3p = params  # weights bf16; biases f32; w3p/b3p pre-padded to 128
    B = h.shape[0]

    # Pad only to the sublane multiple (8); already-aligned batches pay no extra HBM pass.
    Bp = _round_up(max(B, 8), 8)
    hp = h if Bp == B else jnp.pad(h, ((0, Bp - B), (0, 0)))

    # Batch tile: up to 512 rows/step.  If a mid-size batch would collapse to a single grid
    # step, split it so both v7x TensorCores get work on the "parallel" axis.
    TM = min(MAX_TM, Bp)
    if Bp > 32 and pl.cdiv(Bp, TM) < 2:
        TM = _round_up(pl.cdiv(Bp, 2), 16)
    n_tiles = pl.cdiv(Bp, TM)

    # Constant block index -> weights/biases stay VMEM-resident across grid steps.
    weight_spec = lambda shape: pl.BlockSpec(shape, lambda i: (0, 0))

    flops = 2 * Bp * HIDDEN * (HIDDEN + HIDDEN + OUT_PAD)
    bytes_accessed = (
        2 * HIDDEN * HIDDEN * 2 + HIDDEN * OUT_PAD * 2      # bf16 weights
        + 2 * HIDDEN * 4 + OUT_PAD * 4                       # f32 biases
        + Bp * HIDDEN * hp.dtype.itemsize                    # activations in
        + Bp * OUT_PAD * 2                                   # bf16 activations out
    )

    out_padded = pl.pallas_call(
        mlp_kernel,
        out_shape=jax.ShapeDtypeStruct((Bp, OUT_PAD), jnp.bfloat16),
        grid=(n_tiles,),
        in_specs=[
            pl.BlockSpec((TM, HIDDEN), lambda i: (i, 0)),   # x (tiled over batch)
            weight_spec((HIDDEN, HIDDEN)),                  # w1
            weight_spec((1, HIDDEN)),                       # b1
            weight_spec((HIDDEN, HIDDEN)),                  # w2
            weight_spec((1, HIDDEN)),                       # b2
            weight_spec((HIDDEN, OUT_PAD)),                 # w3 (pre-padded)
            weight_spec((1, OUT_PAD)),                      # b3 (pre-padded)
        ],
        out_specs=pl.BlockSpec((TM, OUT_PAD), lambda i: (i, 0)),
        compiler_params=pltpu.CompilerParams(
            dimension_semantics=("parallel",),
        ),
        cost_estimate=pl.CostEstimate(
            flops=flops, transcendentals=0, bytes_accessed=bytes_accessed
        ),
    )(hp, w1, b1, w2, b2, w3p, b3p)

    return out_padded[:B, :OUT].astype(jnp.float32)


def init_params(key):
    """PyTorch-default-style init: U(-1/sqrt(fan_in), +1/sqrt(fan_in)).
    Weights are cast to bf16 and the last layer is zero-padded to 128 output lanes here,
    once, so the per-call launch path has no padding work."""
    ks = jax.random.split(key, 6)

    def linear(kw, kb, fan_in, fan_out):
        bound = 1.0 / jnp.sqrt(fan_in)
        w = jax.random.uniform(kw, (fan_in, fan_out), jnp.float32, -bound, bound)
        b = jax.random.uniform(kb, (1, fan_out), jnp.float32, -bound, bound)
        return w, b

    w1, b1 = linear(ks[0], ks[1], HIDDEN, HIDDEN)
    w2, b2 = linear(ks[2], ks[3], HIDDEN, HIDDEN)
    w3, b3 = linear(ks[4], ks[5], HIDDEN, OUT)

    w3p = jnp.zeros((HIDDEN, OUT_PAD), jnp.float32).at[:, :OUT].set(w3)
    b3p = jnp.zeros((1, OUT_PAD), jnp.float32).at[:, :OUT].set(b3)

    return (
        w1.astype(jnp.bfloat16), b1,
        w2.astype(jnp.bfloat16), b2,
        w3p.astype(jnp.bfloat16), b3p,
    )


def reference(h, params):
    """Pure-JAX reference using the same bf16-operand / f32-accumulate / bf16-store arithmetic."""
    w1, b1, w2, b2, w3p, b3p = params
    x = h.astype(jnp.bfloat16)
    x = jnp.maximum(jnp.dot(x, w1, preferred_element_type=jnp.float32) + b1, 0.0)
    x = jnp.maximum(jnp.dot(x.astype(jnp.bfloat16), w2, preferred_element_type=jnp.float32) + b2, 0.0)
    out = jnp.dot(x.astype(jnp.bfloat16), w3p, preferred_element_type=jnp.float32) + b3p
    return out[:, :OUT].astype(jnp.bfloat16).astype(jnp.float32)


if __name__ == "__main__":
    key = jax.random.PRNGKey(0)
    k_in, k_par = jax.random.split(key)
    params = init_params(k_par)

    # Small single-tile batch (architectural-floor path).
    B = 8
    h = jax.random.normal(k_in, (B, HIDDEN), jnp.float32)
    out = jax.block_until_ready(label_predictor(h, params))
    ref = reference(h, params)
    assert out.shape == (B, OUT), out.shape
    assert jnp.allclose(out, ref, atol=2e-2, rtol=2e-2), float(jnp.max(jnp.abs(out - ref)))

    # Non-aligned batch exercising the pad-to-8 + split-into-2-tiles + masked-last-tile path.
    B2 = 100
    h2 = jax.random.normal(jax.random.PRNGKey(1), (B2, HIDDEN), jnp.float32)
    out2 = jax.block_until_ready(label_predictor(h2, params))
    ref2 = reference(h2, params)
    assert out2.shape == (B2, OUT), out2.shape
    assert jnp.allclose(out2, ref2, atol=2e-2, rtol=2e-2), float(jnp.max(jnp.abs(out2 - ref2)))

    print("KERNEL_OK")
</pallas_src>

<mosaic_0001>
module attributes {stable_mosaic.version = 11 : i64} {
  func.func @mlp_kernel(%arg0: i32, %arg1: memref<8x512xf32, #tpu.memory_space<vmem>>, %arg2: memref<512x512xbf16, #tpu.memory_space<vmem>>, %arg3: memref<1x512xf32, #tpu.memory_space<vmem>>, %arg4: memref<512x512xbf16, #tpu.memory_space<vmem>>, %arg5: memref<1x512xf32, #tpu.memory_space<vmem>>, %arg6: memref<512x128xbf16, #tpu.memory_space<vmem>>, %arg7: memref<1x128xf32, #tpu.memory_space<vmem>>, %arg8: memref<8x128xbf16, #tpu.memory_space<vmem>>) attributes {dimension_semantics = [#tpu.dimension_semantics<parallel>], iteration_bounds = array<i64: 1>, scalar_prefetch = 0 : i64, scratch_operands = 0 : i64, tpu.core_type = #tpu.core_type<tc>, window_params = [{transform_indices = @transform_0, window_bounds = array<i64: 8, 512>}, {pipeline_mode = #tpu.pipeline_mode<synchronous>, transform_indices = @transform_1, window_bounds = array<i64: 512, 512>}, {pipeline_mode = #tpu.pipeline_mode<synchronous>, transform_indices = @transform_2, window_bounds = array<i64: 1, 512>}, {pipeline_mode = #tpu.pipeline_mode<synchronous>, transform_indices = @transform_3, window_bounds = array<i64: 512, 512>}, {pipeline_mode = #tpu.pipeline_mode<synchronous>, transform_indices = @transform_4, window_bounds = array<i64: 1, 512>}, {pipeline_mode = #tpu.pipeline_mode<synchronous>, transform_indices = @transform_5, window_bounds = array<i64: 512, 128>}, {pipeline_mode = #tpu.pipeline_mode<synchronous>, transform_indices = @transform_6, window_bounds = array<i64: 1, 128>}, {transform_indices = @transform_7, window_bounds = array<i64: 8, 128>}]} {
    %c0 = arith.constant 0 : index
    %c0_0 = arith.constant 0 : index
    %0 = vector.load %arg1[%c0, %c0_0] : memref<8x512xf32, #tpu.memory_space<vmem>>, vector<8x512xf32>
    %1 = arith.truncf %0 : vector<8x512xf32> to vector<8x512xbf16>
    %c0_1 = arith.constant 0 : index
    %c0_2 = arith.constant 0 : index
    %2 = vector.load %arg2[%c0_1, %c0_2] : memref<512x512xbf16, #tpu.memory_space<vmem>>, vector<512x512xbf16>
    %cst = arith.constant dense<0.000000e+00> : vector<8x512xf32>
    %3 = tpu.matmul %1, %2, %cst {dimension_numbers = #tpu.dot_dimension_numbers<[1], [0], [0], [1], [0, 0, 1, 1], [], []>} : vector<8x512xbf16>, vector<512x512xbf16>, vector<8x512xf32> -> vector<8x512xf32>
    %c0_3 = arith.constant 0 : index
    %c0_4 = arith.constant 0 : index
    %4 = vector.load %arg3[%c0_3, %c0_4] : memref<1x512xf32, #tpu.memory_space<vmem>>, vector<1x512xf32>
    %5 = vector.broadcast %4 : vector<1x512xf32> to vector<8x512xf32>
    %6 = arith.addf %3, %5 : vector<8x512xf32>
    %cst_5 = arith.constant 0.000000e+00 : f32
    %7 = vector.broadcast %cst_5 : f32 to vector<8x512xf32>
    %8 = arith.maximumf %6, %7 : vector<8x512xf32>
    %9 = arith.truncf %8 : vector<8x512xf32> to vector<8x512xbf16>
    %c0_6 = arith.constant 0 : index
    %c0_7 = arith.constant 0 : index
    %10 = vector.load %arg4[%c0_6, %c0_7] : memref<512x512xbf16, #tpu.memory_space<vmem>>, vector<512x512xbf16>
    %cst_8 = arith.constant dense<0.000000e+00> : vector<8x512xf32>
    %11 = tpu.matmul %9, %10, %cst_8 {dimension_numbers = #tpu.dot_dimension_numbers<[1], [0], [0], [1], [0, 0, 1, 1], [], []>} : vector<8x512xbf16>, vector<512x512xbf16>, vector<8x512xf32> -> vector<8x512xf32>
    %c0_9 = arith.constant 0 : index
    %c0_10 = arith.constant 0 : index
    %12 = vector.load %arg5[%c0_9, %c0_10] : memref<1x512xf32, #tpu.memory_space<vmem>>, vector<1x512xf32>
    %13 = vector.broadcast %12 : vector<1x512xf32> to vector<8x512xf32>
    %14 = arith.addf %11, %13 : vector<8x512xf32>
    %cst_11 = arith.constant 0.000000e+00 : f32
    %15 = vector.broadcast %cst_11 : f32 to vector<8x512xf32>
    %16 = arith.maximumf %14, %15 : vector<8x512xf32>
    %17 = arith.truncf %16 : vector<8x512xf32> to vector<8x512xbf16>
    %c0_12 = arith.constant 0 : index
    %c0_13 = arith.constant 0 : index
    %18 = vector.load %arg6[%c0_12, %c0_13] : memref<512x128xbf16, #tpu.memory_space<vmem>>, vector<512x128xbf16>
    %cst_14 = arith.constant dense<0.000000e+00> : vector<8x128xf32>
    %19 = tpu.matmul %17, %18, %cst_14 {dimension_numbers = #tpu.dot_dimension_numbers<[1], [0], [0], [1], [0, 0, 1, 1], [], []>} : vector<8x512xbf16>, vector<512x128xbf16>, vector<8x128xf32> -> vector<8x128xf32>
    %c0_15 = arith.constant 0 : index
    %c0_16 = arith.constant 0 : index
    %20 = vector.load %arg7[%c0_15, %c0_16] : memref<1x128xf32, #tpu.memory_space<vmem>>, vector<1x128xf32>
    %21 = vector.broadcast %20 : vector<1x128xf32> to vector<8x128xf32>
    %22 = arith.addf %19, %21 : vector<8x128xf32>
    %23 = arith.truncf %22 : vector<8x128xf32> to vector<8x128xbf16>
    %c0_17 = arith.constant 0 : index
    %c0_18 = arith.constant 0 : index
    %24 = vector.load %arg8[%c0_17, %c0_18] : memref<8x128xbf16, #tpu.memory_space<vmem>>, vector<8x128xbf16>
    tpu.vector_store %arg8[%c0_17, %c0_18], %23 {strides = array<i32>} : memref<8x128xbf16, #tpu.memory_space<vmem>>, vector<8x128xbf16>,
    return
  }
  func.func @transform_0(%arg0: i32) -> (i32, i32) {
    %c0_i32 = arith.constant 0 : i32
    %c0_i32_0 = arith.constant 0 : i32
    return %arg0, %c0_i32 : i32, i32
  }
  func.func @transform_1(%arg0: i32) -> (i32, i32) {
    %c0_i32 = arith.constant 0 : i32
    %c0_i32_0 = arith.constant 0 : i32
    %c0_i32_1 = arith.constant 0 : i32
    return %c0_i32, %c0_i32_0 : i32, i32
  }
  func.func @transform_2(%arg0: i32) -> (i32, i32) {
    %c0_i32 = arith.constant 0 : i32
    %c0_i32_0 = arith.constant 0 : i32
    %c0_i32_1 = arith.constant 0 : i32
    return %c0_i32, %c0_i32_0 : i32, i32
  }
  func.func @transform_3(%arg0: i32) -> (i32, i32) {
    %c0_i32 = arith.constant 0 : i32
    %c0_i32_0 = arith.constant 0 : i32
    %c0_i32_1 = arith.constant 0 : i32
    return %c0_i32, %c0_i32_0 : i32, i32
  }
  func.func @transform_4(%arg0: i32) -> (i32, i32) {
    %c0_i32 = arith.constant 0 : i32
    %c0_i32_0 = arith.constant 0 : i32
    %c0_i32_1 = arith.constant 0 : i32
    return %c0_i32, %c0_i32_0 : i32, i32
  }
  func.func @transform_5(%arg0: i32) -> (i32, i32) {
    %c0_i32 = arith.constant 0 : i32
    %c0_i32_0 = arith.constant 0 : i32
    %c0_i32_1 = arith.constant 0 : i32
    return %c0_i32, %c0_i32_0 : i32, i32
  }
  func.func @transform_6(%arg0: i32) -> (i32, i32) {
    %c0_i32 = arith.constant 0 : i32
    %c0_i32_0 = arith.constant 0 : i32
    %c0_i32_1 = arith.constant 0 : i32
    return %c0_i32, %c0_i32_0 : i32, i32
  }
  func.func @transform_7(%arg0: i32) -> (i32, i32) {
    %c0_i32 = arith.constant 0 : i32
    %c0_i32_0 = arith.constant 0 : i32
    return %arg0, %c0_i32 : i32, i32
  }
}

</mosaic_0001>

<llo_original>
// kernel: tpu_custom_call.1
$region0: #{tpu_custom_call.1}
  #allocation0 [shape = 'u32[]', space=smem, size = 0x4, offset = 0x4, fixed_abs, tag = 'smem constant byte address 0x4 - core index']
  #allocation1 [shape = 'u32[72,128]{1,0:T(1,128)}', space=vmem, size = 0x9000, scoped, tag = 'internal scratch']
  %s0 = inlined_call_operand.hbm [shape: f32[8,512], index: 0, kind: input, shape index: {}]
  %s1 = inlined_call_operand.hbm [shape: bf16[512,512], index: 1, kind: input, shape index: {}]
  %s2 = inlined_call_operand.hbm [shape: f32[1,512], index: 2, kind: input, shape index: {}]
  %s3 = inlined_call_operand.hbm [shape: bf16[512,512], index: 3, kind: input, shape index: {}]
  %s4 = inlined_call_operand.hbm [shape: f32[1,512], index: 4, kind: input, shape index: {}]
  %s5 = inlined_call_operand.hbm [shape: bf16[512,128], index: 5, kind: input, shape index: {}]
  %s6 = inlined_call_operand.vmem [shape: f32[1,128], index: 6, kind: input, shape index: {}]
  %s7 = inlined_call_operand.hbm [shape: bf16[8,128], index: 7, kind: output, shape index: {}]
  %s8 = sld [smem:[#allocation0]]
  $region62: #{tpu_custom_call.1} parent=0
    _
  %s10 = ssub.s32 1, %s8
  %s11 = scalar_select 0, %s10, %s8
  $region1: #{tpu_custom_call.1} parent=0
    #allocation2 [shape = 'u8[16384]{0}', space=vmem, size = 0x4000, scoped, tag = 'input window, operand 0, single buffered']
    #allocation3 [shape = 's32[1]{0}', space=sflag, size = 0x4, scoped, tag = 'scoped memory for tpu_custom_call.1']
    #allocation4 [shape = 's32[1]{0}', space=sflag, size = 0x4, scoped, tag = 'scoped memory for tpu_custom_call.1']
    #allocation5 [shape = 'u8[524288]{0}', space=vmem, size = 0x80000, scoped, tag = 'input window, operand 1, single buffered']
    #allocation6 [shape = 's32[1]{0}', space=sflag, size = 0x4, scoped, tag = 'scoped memory for tpu_custom_call.1']
    #allocation7 [shape = 'u8[2048]{0}', space=vmem, size = 0x800, scoped, tag = 'input window, operand 2, single buffered']
    #allocation8 [shape = 'u8[524288]{0}', space=vmem, size = 0x80000, scoped, tag = 'input window, operand 3, single buffered']
    #allocation9 [shape = 's32[1]{0}', space=sflag, size = 0x4, scoped, tag = 'scoped memory for tpu_custom_call.1']
    #allocation10 [shape = 'u8[2048]{0}', space=vmem, size = 0x800, scoped, tag = 'input window, operand 4, single buffered']
    #allocation11 [shape = 'u8[131072]{0}', space=vmem, size = 0x20000, scoped, tag = 'input window, operand 5, single buffered']
    #allocation12 [shape = 's32[1]{0}', space=sflag, size = 0x4, scoped, tag = 'scoped memory for tpu_custom_call.1']
    #allocation13 [shape = 'u8[2048]{0}', space=vmem, size = 0x800, scoped, tag = 'output window, operand 0, single buffered']
    %12 = vsyncpa [#allocation3], 0
    %13 = vsyncpa [#allocation6], 0
    %14 = vsyncpa [#allocation9], 0
    %15 = vsyncpa [#allocation12], 0
    %16 = vsyncpa [#allocation4], 0
    // Predicated region
    $region2: #{tpu_custom_call.1} parent=1 // pred_check
      _
    $region3: #{tpu_custom_call.1} parent=1 // pred_check_branch
      %18 = sbr.rel (0) target = $region5
    $region4: #{tpu_custom_call.1} parent=1 // pred_region
      %20 = vsyncadd [#allocation3], 0
      %s22 = sshll.u32 %s0, 4
      %s23 = int_to_ptr.hbm [resolvable:$true] %s22
      %s24 = sshll.u32 [#allocation2], 4
      %s25 = int_to_ptr.vmem [resolvable:$true] %s24
      %27 = dma.hbm_to_vmem [thread:$0]  %s23, 512, %s25, [#allocation3]
    $region5: #{tpu_custom_call.1} parent=1 // pred_fallthru
      _
    // Predicated region
    $region6: #{tpu_custom_call.1} parent=1 // pred_check
      _
    $region7: #{tpu_custom_call.1} parent=1 // pred_check_branch
      %29 = sbr.rel (0) target = $region9
    $region8: #{tpu_custom_call.1} parent=1 // pred_region
      %31 = vsyncadd [#allocation6], 0
      %s32 = sshll.u32 %s1, 4
      %s33 = int_to_ptr.hbm [resolvable:$true] %s32
      %s34 = sshll.u32 [#allocation5], 4
      %s35 = int_to_ptr.vmem [resolvable:$true] %s34
      %40 = dma.hbm_to_vmem [thread:$0]  %s33, 16384, %s35, [#allocation6], 256, 256, 16
    $region9: #{tpu_custom_call.1} parent=1 // pred_fallthru
      _
    // Predicated region
    $region10: #{tpu_custom_call.1} parent=1 // pred_check
      _
    $region11: #{tpu_custom_call.1} parent=1 // pred_check_branch
      %42 = sbr.rel (0) target = $region13
    $region12: #{tpu_custom_call.1} parent=1 // pred_region
      %44 = vsyncadd [#allocation6], 0
      %s46 = sshll.u32 %s2, 4
      %s47 = int_to_ptr.hbm [resolvable:$true] %s46
      %s48 = sshll.u32 [#allocation7], 4
      %s49 = int_to_ptr.vmem [resolvable:$true] %s48
      %51 = dma.hbm_to_vmem [thread:$0]  %s47, 64, %s49, [#allocation6]
    $region13: #{tpu_custom_call.1} parent=1 // pred_fallthru
      _
    // Predicated region
    $region14: #{tpu_custom_call.1} parent=1 // pred_check
      _
    $region15: #{tpu_custom_call.1} parent=1 // pred_check_branch
      %53 = sbr.rel (0) target = $region17
    $region16: #{tpu_custom_call.1} parent=1 // pred_region
      %55 = vsyncadd [#allocation9], 0
      %s56 = sshll.u32 %s3, 4
      %s57 = int_to_ptr.hbm [resolvable:$true] %s56
      %s58 = sshll.u32 [#allocation8], 4
      %s59 = int_to_ptr.vmem [resolvable:$true] %s58
      %64 = dma.hbm_to_vmem [thread:$0]  %s57, 16384, %s59, [#allocation9], 256, 256, 16
    $region17: #{tpu_custom_call.1} parent=1 // pred_fallthru
      _
    // Predicated region
    $region18: #{tpu_custom_call.1} parent=1 // pred_check
      _
    $region19: #{tpu_custom_call.1} parent=1 // pred_check_branch
      %66 = sbr.rel (0) target = $region21
    $region20: #{tpu_custom_call.1} parent=1 // pred_region
      %68 = vsyncadd [#allocation9], 0
      %s70 = sshll.u32 %s4, 4
      %s71 = int_to_ptr.hbm [resolvable:$true] %s70
      %s72 = sshll.u32 [#allocation10], 4
      %s73 = int_to_ptr.vmem [resolvable:$true] %s72
      %75 = dma.hbm_to_vmem [thread:$0]  %s71, 64, %s73, [#allocation9]
    $region21: #{tpu_custom_call.1} parent=1 // pred_fallthru
      _
    // Predicated region
    $region22: #{tpu_custom_call.1} parent=1 // pred_check
      _
    $region23: #{tpu_custom_call.1} parent=1 // pred_check_branch
      %77 = sbr.rel (0) target = $region25
    $region24: #{tpu_custom_call.1} parent=1 // pred_region
      %79 = vsyncadd [#allocation12], 0
      %s80 = sshll.u32 %s5, 4
      %s81 = int_to_ptr.hbm [resolvable:$true] %s80
      %s82 = sshll.u32 [#allocation11], 4
      %s83 = int_to_ptr.vmem [resolvable:$true] %s82
      %88 = dma.hbm_to_vmem [thread:$0]  %s81, 4096, %s83, [#allocation12], 64, 64, 4
    $region25: #{tpu_custom_call.1} parent=1 // pred_fallthru
      _
    // Predicated region
    $region26: #{tpu_custom_call.1} parent=1 // pred_check
      _
    $region27: #{tpu_custom_call.1} parent=1 // pred_check_branch
      %90 = sbr.rel (0) target = $region29
    $region28: #{tpu_custom_call.1} parent=1 // pred_region
      _
    $region29: #{tpu_custom_call.1} parent=1 // pred_fallthru
      _
    // Predicated region
    $region30: #{tpu_custom_call.1} parent=1 // pred_check
      _
    $region31: #{tpu_custom_call.1} parent=1 // pred_check_branch
      %92 = sbr.rel (0) target = $region33
    $region32: #{tpu_custom_call.1} parent=1 // pred_region
      %94 = dma.done [#allocation3], 512
    $region33: #{tpu_custom_call.1} parent=1 // pred_fallthru
      _
    // Predicated region
    $region34: #{tpu_custom_call.1} parent=1 // pred_check
      _
    $region35: #{tpu_custom_call.1} parent=1 // pred_check_branch
      %96 = sbr.rel (0) target = $region37
    $region36: #{tpu_custom_call.1} parent=1 // pred_region
      %98 = dma.done [#allocation6], 16384
    $region37: #{tpu_custom_call.1} parent=1 // pred_fallthru
      _
    // Predicated region
    $region38: #{tpu_custom_call.1} parent=1 // pred_check
      _
    $region39: #{tpu_custom_call.1} parent=1 // pred_check_branch
      %100 = sbr.rel (0) target = $region41
    $region40: #{tpu_custom_call.1} parent=1 // pred_region
      %102 = dma.done [#allocation6], 64
    $region41: #{tpu_custom_call.1} parent=1 // pred_fallthru
      _
    // Predicated region
    $region42: #{tpu_custom_call.1} parent=1 // pred_check
      _
    $region43: #{tpu_custom_call.1} parent=1 // pred_check_branch
      %104 = sbr.rel (0) target = $region45
    $region44: #{tpu_custom_call.1} parent=1 // pred_region
      %106 = dma.done [#allocation9], 16384
    $region45: #{tpu_custom_call.1} parent=1 // pred_fallthru
      _
    // Predicated region
    $region46: #{tpu_custom_call.1} parent=1 // pred_check
      _
    $region47: #{tpu_custom_call.1} parent=1 // pred_check_branch
      %108 = sbr.rel (0) target = $region49
    $region48: #{tpu_custom_call.1} parent=1 // pred_region
      %110 = dma.done [#allocation9], 64
    $region49: #{tpu_custom_call.1} parent=1 // pred_fallthru
      _
    // Predicated region
    $region50: #{tpu_custom_call.1} parent=1 // pred_check
      _
    $region51: #{tpu_custom_call.1} parent=1 // pred_check_branch
      %112 = sbr.rel (0) target = $region53
    $region52: #{tpu_custom_call.1} parent=1 // pred_region
      %114 = dma.done [#allocation12], 4096
    $region53: #{tpu_custom_call.1} parent=1 // pred_fallthru
      _
    %v115 = vld [vmem:[#allocation2] sm:$0xff]
    %v116 = vld [vmem:[#allocation2 + $0x8] sm:$0xff]
    %v117 = vld [vmem:[#allocation2 + $0x10] sm:$0xff]
    %v118 = vld [vmem:[#allocation2 + $0x18] sm:$0xff]
    %v119 = vpack.c.bf16 %v115, %v115
    %v120 = vpack.c.bf16 %v116, %v116
    %v121 = vpack.c.bf16 %v117, %v117
    %v122 = vpack.c.bf16 %v118, %v118
    %v123 = vld [vmem:[#allocation5] sm:$0xff]
    %v124 = vld [vmem:[#allocation5 + $0x8] sm:$0xff]
    %v125 = vld [vmem:[#allocation5 + $0x10] sm:$0xff]
    %v126 = vld [vmem:[#allocation5 + $0x18] sm:$0xff]
    %v127 = vld [vmem:[#allocation5 + $0x20] sm:$0xff]
    %v128 = vld [vmem:[#allocation5 + $0x28] sm:$0xff]
    %v129 = vld [vmem:[#allocation5 + $0x30] sm:$0xff]
    %v130 = vld [vmem:[#allocation5 + $0x38] sm:$0xff]
    %v131 = vld [vmem:[#allocation5 + $0x40] sm:$0xff]
    %v132 = vld [vmem:[#allocation5 + $0x48] sm:$0xff]
    %v133 = vld [vmem:[#allocation5 + $0x50] sm:$0xff]
    %v134 = vld [vmem:[#allocation5 + $0x58] sm:$0xff]
    %v135 = vld [vmem:[#allocation5 + $0x60] sm:$0xff]
    %v136 = vld [vmem:[#allocation5 + $0x68] sm:$0xff]
    %v137 = vld [vmem:[#allocation5 + $0x70] sm:$0xff]
    %v138 = vld [vmem:[#allocation5 + $0x78] sm:$0xff]
    %v139 = vld [vmem:[#allocation5 + $0x80] sm:$0xff]
    %v140 = vld [vmem:[#allocation5 + $0x88] sm:$0xff]
    %v141 = vld [vmem:[#allocation5 + $0x90] sm:$0xff]
    %v142 = vld [vmem:[#allocation5 + $0x98] sm:$0xff]
    %v143 = vld [vmem:[#allocation5 + $0xa0] sm:$0xff]
    %v144 = vld [vmem:[#allocation5 + $0xa8] sm:$0xff]
    %v145 = vld [vmem:[#allocation5 + $0xb0] sm:$0xff]
    %v146 = vld [vmem:[#allocation5 + $0xb8] sm:$0xff]
    %v147 = vld [vmem:[#allocation5 + $0xc0] sm:$0xff]
    %v148 = vld [vmem:[#allocation5 + $0xc8] sm:$0xff]
    %v149 = vld [vmem:[#allocation5 + $0xd0] sm:$0xff]
    %v150 = vld [vmem:[#allocation5 + $0xd8] sm:$0xff]
    %v151 = vld [vmem:[#allocation5 + $0xe0] sm:$0xff]
    %v152 = vld [vmem:[#allocation5 + $0xe8] sm:$0xff]
    %v153 = vld [vmem:[#allocation5 + $0xf0] sm:$0xff]
    %v154 = vld [vmem:[#allocation5 + $0xf8] sm:$0xff]
    %v155 = vld [vmem:[#allocation5 + $0x100] sm:$0xff]
    %v156 = vld [vmem:[#allocation5 + $0x108] sm:$0xff]
    %v157 = vld [vmem:[#allocation5 + $0x110] sm:$0xff]
    %v158 = vld [vmem:[#allocation5 + $0x118] sm:$0xff]
    %v159 = vld [vmem:[#allocation5 + $0x120] sm:$0xff]
    %v160 = vld [vmem:[#allocation5 + $0x128] sm:$0xff]
    %v161 = vld [vmem:[#allocation5 + $0x130] sm:$0xff]
    %v162 = vld [vmem:[#allocation5 + $0x138] sm:$0xff]
    %v163 = vld [vmem:[#allocation5 + $0x140] sm:$0xff]
    %v164 = vld [vmem:[#allocation5 + $0x148] sm:$0xff]
    %v165 = vld [vmem:[#allocation5 + $0x150] sm:$0xff]
    %v166 = vld [vmem:[#allocation5 + $0x158] sm:$0xff]
    %v167 = vld [vmem:[#allocation5 + $0x160] sm:$0xff]
    %v168 = vld [vmem:[#allocation5 + $0x168] sm:$0xff]
    %v169 = vld [vmem:[#allocation5 + $0x170] sm:$0xff]
    %v170 = vld [vmem:[#allocation5 + $0x178] sm:$0xff]
    %v171 = vld [vmem:[#allocation5 + $0x180] sm:$0xff]
    %v172 = vld [vmem:[#allocation5 + $0x188] sm:$0xff]
    %v173 = vld [vmem:[#allocation5 + $0x190] sm:$0xff]
    %v174 = vld [vmem:[#allocation5 + $0x198] sm:$0xff]
    %v175 = vld [vmem:[#allocation5 + $0x1a0] sm:$0xff]
    %v176 = vld [vmem:[#allocation5 + $0x1a8] sm:$0xff]
    %v177 = vld [vmem:[#allocation5 + $0x1b0] sm:$0xff]
    %v178 = vld [vmem:[#allocation5 + $0x1b8] sm:$0xff]
    %v179 = vld [vmem:[#allocation5 + $0x1c0] sm:$0xff]
    %v180 = vld [vmem:[#allocation5 + $0x1c8] sm:$0xff]
    %v181 = vld [vmem:[#allocation5 + $0x1d0] sm:$0xff]
    %v182 = vld [vmem:[#allocation5 + $0x1d8] sm:$0xff]
    %v183 = vld [vmem:[#allocation5 + $0x1e0] sm:$0xff]
    %v184 = vld [vmem:[#allocation5 + $0x1e8] sm:$0xff]
    %v185 = vld [vmem:[#allocation5 + $0x1f0] sm:$0xff]
    %v186 = vld [vmem:[#allocation5 + $0x1f8] sm:$0xff]
    %v187 = vld [vmem:[#allocation5 + $0x200] sm:$0xff]
    %v188 = vld [vmem:[#allocation5 + $0x208] sm:$0xff]
    %v189 = vld [vmem:[#allocation5 + $0x210] sm:$0xff]
    %v190 = vld [vmem:[#allocation5 + $0x218] sm:$0xff]
    %v191 = vld [vmem:[#allocation5 + $0x220] sm:$0xff]
    %v192 = vld [vmem:[#allocation5 + $0x228] sm:$0xff]
    %v193 = vld [vmem:[#allocation5 + $0x230] sm:$0xff]
    %v194 = vld [vmem:[#allocation5 + $0x238] sm:$0xff]
    %v195 = vld [vmem:[#allocation5 + $0x240] sm:$0xff]
    %v196 = vld [vmem:[#allocation5 + $0x248] sm:$0xff]
    %v197 = vld [vmem:[#allocation5 + $0x250] sm:$0xff]
    %v198 = vld [vmem:[#allocation5 + $0x258] sm:$0xff]
    %v199 = vld [vmem:[#allocation5 + $0x260] sm:$0xff]
    %v200 = vld [vmem:[#allocation5 + $0x268] sm:$0xff]
    %v201 = vld [vmem:[#allocation5 + $0x270] sm:$0xff]
    %v202 = vld [vmem:[#allocation5 + $0x278] sm:$0xff]
    %v203 = vld [vmem:[#allocation5 + $0x280] sm:$0xff]
    %v204 = vld [vmem:[#allocation5 + $0x288] sm:$0xff]
    %v205 = vld [vmem:[#allocation5 + $0x290] sm:$0xff]
    %v206 = vld [vmem:[#allocation5 + $0x298] sm:$0xff]
    %v207 = vld [vmem:[#allocation5 + $0x2a0] sm:$0xff]
    %v208 = vld [vmem:[#allocation5 + $0x2a8] sm:$0xff]
    %v209 = vld [vmem:[#allocation5 + $0x2b0] sm:$0xff]
    %v210 = vld [vmem:[#allocation5 + $0x2b8] sm:$0xff]
    %v211 = vld [vmem:[#allocation5 + $0x2c0] sm:$0xff]
    %v212 = vld [vmem:[#allocation5 + $0x2c8] sm:$0xff]
    %v213 = vld [vmem:[#allocation5 + $0x2d0] sm:$0xff]
    %v214 = vld [vmem:[#allocation5 + $0x2d8] sm:$0xff]
    %v215 = vld [vmem:[#allocation5 + $0x2e0] sm:$0xff]
    %v216 = vld [vmem:[#allocation5 + $0x2e8] sm:$0xff]
    %v217 = vld [vmem:[#allocation5 + $0x2f0] sm:$0xff]
    %v218 = vld [vmem:[#allocation5 + $0x2f8] sm:$0xff]
    %v219 = vld [vmem:[#allocation5 + $0x300] sm:$0xff]
    %v220 = vld [vmem:[#allocation5 + $0x308] sm:$0xff]
    %v221 = vld [vmem:[#allocation5 + $0x310] sm:$0xff]
    %v222 = vld [vmem:[#allocation5 + $0x318] sm:$0xff]
    %v223 = vld [vmem:[#allocation5 + $0x320] sm:$0xff]
    %v224 = vld [vmem:[#allocation5 + $0x328] sm:$0xff]
    %v225 = vld [vmem:[#allocation5 + $0x330] sm:$0xff]
    %v226 = vld [vmem:[#allocation5 + $0x338] sm:$0xff]
    %v227 = vld [vmem:[#allocation5 + $0x340] sm:$0xff]
    %v228 = vld [vmem:[#allocation5 + $0x348] sm:$0xff]
    %v229 = vld [vmem:[#allocation5 + $0x350] sm:$0xff]
    %v230 = vld [vmem:[#allocation5 + $0x358] sm:$0xff]
    %v231 = vld [vmem:[#allocation5 + $0x360] sm:$0xff]
    %v232 = vld [vmem:[#allocation5 + $0x368] sm:$0xff]
    %v233 = vld [vmem:[#allocation5 + $0x370] sm:$0xff]
    %v234 = vld [vmem:[#allocation5 + $0x378] sm:$0xff]
    %v235 = vld [vmem:[#allocation5 + $0x380] sm:$0xff]
    %v236 = vld [vmem:[#allocation5 + $0x388] sm:$0xff]
    %v237 = vld [vmem:[#allocation5 + $0x390] sm:$0xff]
    %v238 = vld [vmem:[#allocation5 + $0x398] sm:$0xff]
    %v239 = vld [vmem:[#allocation5 + $0x3a0] sm:$0xff]
    %v240 = vld [vmem:[#allocation5 + $0x3a8] sm:$0xff]
    %v241 = vld [vmem:[#allocation5 + $0x3b0] sm:$0xff]
    %v242 = vld [vmem:[#allocation5 + $0x3b8] sm:$0xff]
    %v243 = vld [vmem:[#allocation5 + $0x3c0] sm:$0xff]
    %v244 = vld [vmem:[#allocation5 + $0x3c8] sm:$0xff]
    %v245 = vld [vmem:[#allocation5 + $0x3d0] sm:$0xff]
    %v246 = vld [vmem:[#allocation5 + $0x3d8] sm:$0xff]
    %v247 = vld [vmem:[#allocation5 + $0x3e0] sm:$0xff]
    %v248 = vld [vmem:[#allocation5 + $0x3e8] sm:$0xff]
    %v249 = vld [vmem:[#allocation5 + $0x3f0] sm:$0xff]
    %v250 = vld [vmem:[#allocation5 + $0x3f8] sm:$0xff]
    %v251 = vld [vmem:[#allocation7] sm:$0xf]
    %v253 = vperm.slane %v251, 0
    %v254 = vperm.slane %v251, 1
    %v255 = vperm.slane %v251, 2
    %v256 = vperm.slane %v251, 3
    %v389 = vunpack.c.l.b16 %v123
    %v390 = vunpack.c.h.b16 %v123
    %v391 = vunpack.c.l.b16 %v124
    %v392 = vunpack.c.h.b16 %v124
    %v393 = vunpack.c.l.b16 %v125
    %v394 = vunpack.c.h.b16 %v125
    %v395 = vunpack.c.l.b16 %v126
    %v396 = vunpack.c.h.b16 %v126
    %v397 = vunpack.c.l.b16 %v127
    %v398 = vunpack.c.h.b16 %v127
    %v399 = vunpack.c.l.b16 %v128
    %v400 = vunpack.c.h.b16 %v128
    %v401 = vunpack.c.l.b16 %v129
    %v402 = vunpack.c.h.b16 %v129
    %v403 = vunpack.c.l.b16 %v130
    %v404 = vunpack.c.h.b16 %v130
    %v405 = vunpack.c.l.b16 %v131
    %v406 = vunpack.c.h.b16 %v131
    %v407 = vunpack.c.l.b16 %v132
    %v408 = vunpack.c.h.b16 %v132
    %v409 = vunpack.c.l.b16 %v133
    %v410 = vunpack.c.h.b16 %v133
    %v411 = vunpack.c.l.b16 %v134
    %v412 = vunpack.c.h.b16 %v134
    %v413 = vunpack.c.l.b16 %v135
    %v414 = vunpack.c.h.b16 %v135
    %v415 = vunpack.c.l.b16 %v136
    %v416 = vunpack.c.h.b16 %v136
    %v417 = vunpack.c.l.b16 %v137
    %v418 = vunpack.c.h.b16 %v137
    %v419 = vunpack.c.l.b16 %v138
    %v420 = vunpack.c.h.b16 %v138
    %v421 = vunpack.c.l.b16 %v139
    %v422 = vunpack.c.h.b16 %v139
    %v423 = vunpack.c.l.b16 %v140
    %v424 = vunpack.c.h.b16 %v140
    %v425 = vunpack.c.l.b16 %v141
    %v426 = vunpack.c.h.b16 %v141
    %v427 = vunpack.c.l.b16 %v142
    %v428 = vunpack.c.h.b16 %v142
    %v429 = vunpack.c.l.b16 %v143
    %v430 = vunpack.c.h.b16 %v143
    %v431 = vunpack.c.l.b16 %v144
    %v432 = vunpack.c.h.b16 %v144
    %v433 = vunpack.c.l.b16 %v145
    %v434 = vunpack.c.h.b16 %v145
    %v435 = vunpack.c.l.b16 %v146
    %v436 = vunpack.c.h.b16 %v146
    %v437 = vunpack.c.l.b16 %v147
    %v438 = vunpack.c.h.b16 %v147
    %v439 = vunpack.c.l.b16 %v148
    %v440 = vunpack.c.h.b16 %v148
    %v441 = vunpack.c.l.b16 %v149
    %v442 = vunpack.c.h.b16 %v149
    %v443 = vunpack.c.l.b16 %v150
    %v444 = vunpack.c.h.b16 %v150
    %v445 = vunpack.c.l.b16 %v151
    %v446 = vunpack.c.h.b16 %v151
    %v447 = vunpack.c.l.b16 %v152
    %v448 = vunpack.c.h.b16 %v152
    %v449 = vunpack.c.l.b16 %v153
    %v450 = vunpack.c.h.b16 %v153
    %v451 = vunpack.c.l.b16 %v154
    %v452 = vunpack.c.h.b16 %v154
    %v453 = vunpack.c.l.b16 %v155
    %v454 = vunpack.c.h.b16 %v155
    %v455 = vunpack.c.l.b16 %v156
    %v456 = vunpack.c.h.b16 %v156
    %v457 = vunpack.c.l.b16 %v157
    %v458 = vunpack.c.h.b16 %v157
    %v459 = vunpack.c.l.b16 %v158
    %v460 = vunpack.c.h.b16 %v158
    %v461 = vunpack.c.l.b16 %v159
    %v462 = vunpack.c.h.b16 %v159
    %v463 = vunpack.c.l.b16 %v160
    %v464 = vunpack.c.h.b16 %v160
    %v465 = vunpack.c.l.b16 %v161
    %v466 = vunpack.c.h.b16 %v161
    %v467 = vunpack.c.l.b16 %v162
    %v468 = vunpack.c.h.b16 %v162
    %v469 = vunpack.c.l.b16 %v163
    %v470 = vunpack.c.h.b16 %v163
    %v471 = vunpack.c.l.b16 %v164
    %v472 = vunpack.c.h.b16 %v164
    %v473 = vunpack.c.l.b16 %v165
    %v474 = vunpack.c.h.b16 %v165
    %v475 = vunpack.c.l.b16 %v166
    %v476 = vunpack.c.h.b16 %v166
    %v477 = vunpack.c.l.b16 %v167
    %v478 = vunpack.c.h.b16 %v167
    %v479 = vunpack.c.l.b16 %v168
    %v480 = vunpack.c.h.b16 %v168
    %v481 = vunpack.c.l.b16 %v169
    %v482 = vunpack.c.h.b16 %v169
    %v483 = vunpack.c.l.b16 %v170
    %v484 = vunpack.c.h.b16 %v170
    %v485 = vunpack.c.l.b16 %v171
    %v486 = vunpack.c.h.b16 %v171
    %v487 = vunpack.c.l.b16 %v172
    %v488 = vunpack.c.h.b16 %v172
    %v489 = vunpack.c.l.b16 %v173
    %v490 = vunpack.c.h.b16 %v173
    %v491 = vunpack.c.l.b16 %v174
    %v492 = vunpack.c.h.b16 %v174
    %v493 = vunpack.c.l.b16 %v175
    %v494 = vunpack.c.h.b16 %v175
    %v495 = vunpack.c.l.b16 %v176
    %v496 = vunpack.c.h.b16 %v176
    %v497 = vunpack.c.l.b16 %v177
    %v498 = vunpack.c.h.b16 %v177
    %v499 = vunpack.c.l.b16 %v178
    %v500 = vunpack.c.h.b16 %v178
    %v501 = vunpack.c.l.b16 %v179
    %v502 = vunpack.c.h.b16 %v179
    %v503 = vunpack.c.l.b16 %v180
    %v504 = vunpack.c.h.b16 %v180
    %v505 = vunpack.c.l.b16 %v181
    %v506 = vunpack.c.h.b16 %v181
    %v507 = vunpack.c.l.b16 %v182
    %v508 = vunpack.c.h.b16 %v182
    %v509 = vunpack.c.l.b16 %v183
    %v510 = vunpack.c.h.b16 %v183
    %v511 = vunpack.c.l.b16 %v184
    %v512 = vunpack.c.h.b16 %v184
    %v513 = vunpack.c.l.b16 %v185
    %v514 = vunpack.c.h.b16 %v185
    %v515 = vunpack.c.l.b16 %v186
    %v516 = vunpack.c.h.b16 %v186
    %v517 = vunpack.c.l.b16 %v187
    %v518 = vunpack.c.h.b16 %v187
    %v519 = vunpack.c.l.b16 %v188
    %v520 = vunpack.c.h.b16 %v188
    %v521 = vunpack.c.l.b16 %v189
    %v522 = vunpack.c.h.b16 %v189
    %v523 = vunpack.c.l.b16 %v190
    %v524 = vunpack.c.h.b16 %v190
    %v525 = vunpack.c.l.b16 %v191
    %v526 = vunpack.c.h.b16 %v191
    %v527 = vunpack.c.l.b16 %v192
    %v528 = vunpack.c.h.b16 %v192
    %v529 = vunpack.c.l.b16 %v193
    %v530 = vunpack.c.h.b16 %v193
    %v531 = vunpack.c.l.b16 %v194
    %v532 = vunpack.c.h.b16 %v194
    %v533 = vunpack.c.l.b16 %v195
    %v534 = vunpack.c.h.b16 %v195
    %v535 = vunpack.c.l.b16 %v196
    %v536 = vunpack.c.h.b16 %v196
    %v537 = vunpack.c.l.b16 %v197
    %v538 = vunpack.c.h.b16 %v197
    %v539 = vunpack.c.l.b16 %v198
    %v540 = vunpack.c.h.b16 %v198
    %v541 = vunpack.c.l.b16 %v199
    %v542 = vunpack.c.h.b16 %v199
    %v543 = vunpack.c.l.b16 %v200
    %v544 = vunpack.c.h.b16 %v200
    %v545 = vunpack.c.l.b16 %v201
    %v546 = vunpack.c.h.b16 %v201
    %v547 = vunpack.c.l.b16 %v202
    %v548 = vunpack.c.h.b16 %v202
    %v549 = vunpack.c.l.b16 %v203
    %v550 = vunpack.c.h.b16 %v203
    %v551 = vunpack.c.l.b16 %v204
    %v552 = vunpack.c.h.b16 %v204
    %v553 = vunpack.c.l.b16 %v205
    %v554 = vunpack.c.h.b16 %v205
    %v555 = vunpack.c.l.b16 %v206
    %v556 = vunpack.c.h.b16 %v206
    %v557 = vunpack.c.l.b16 %v207
    %v558 = vunpack.c.h.b16 %v207
    %v559 = vunpack.c.l.b16 %v208
    %v560 = vunpack.c.h.b16 %v208
    %v561 = vunpack.c.l.b16 %v209
    %v562 = vunpack.c.h.b16 %v209
    %v563 = vunpack.c.l.b16 %v210
    %v564 = vunpack.c.h.b16 %v210
    %v565 = vunpack.c.l.b16 %v211
    %v566 = vunpack.c.h.b16 %v211
    %v567 = vunpack.c.l.b16 %v212
    %v568 = vunpack.c.h.b16 %v212
    %v569 = vunpack.c.l.b16 %v213
    %v570 = vunpack.c.h.b16 %v213
    %v571 = vunpack.c.l.b16 %v214
    %v572 = vunpack.c.h.b16 %v214
    %v573 = vunpack.c.l.b16 %v215
    %v574 = vunpack.c.h.b16 %v215
    %v575 = vunpack.c.l.b16 %v216
    %v576 = vunpack.c.h.b16 %v216
    %v577 = vunpack.c.l.b16 %v217
    %v578 = vunpack.c.h.b16 %v217
    %v579 = vunpack.c.l.b16 %v218
    %v580 = vunpack.c.h.b16 %v218
    %v581 = vunpack.c.l.b16 %v219
    %v582 = vunpack.c.h.b16 %v219
    %v583 = vunpack.c.l.b16 %v220
    %v584 = vunpack.c.h.b16 %v220
    %v585 = vunpack.c.l.b16 %v221
    %v586 = vunpack.c.h.b16 %v221
    %v587 = vunpack.c.l.b16 %v222
    %v588 = vunpack.c.h.b16 %v222
    %v589 = vunpack.c.l.b16 %v223
    %v590 = vunpack.c.h.b16 %v223
    %v591 = vunpack.c.l.b16 %v224
    %v592 = vunpack.c.h.b16 %v224
    %v593 = vunpack.c.l.b16 %v225
    %v594 = vunpack.c.h.b16 %v225
    %v595 = vunpack.c.l.b16 %v226
    %v596 = vunpack.c.h.b16 %v226
    %v597 = vunpack.c.l.b16 %v227
    %v598 = vunpack.c.h.b16 %v227
    %v599 = vunpack.c.l.b16 %v228
    %v600 = vunpack.c.h.b16 %v228
    %v601 = vunpack.c.l.b16 %v229
    %v602 = vunpack.c.h.b16 %v229
    %v603 = vunpack.c.l.b16 %v230
    %v604 = vunpack.c.h.b16 %v230
    %v605 = vunpack.c.l.b16 %v231
    %v606 = vunpack.c.h.b16 %v231
    %v607 = vunpack.c.l.b16 %v232
    %v608 = vunpack.c.h.b16 %v232
    %v609 = vunpack.c.l.b16 %v233
    %v610 = vunpack.c.h.b16 %v233
    %v611 = vunpack.c.l.b16 %v234
    %v612 = vunpack.c.h.b16 %v234
    %v613 = vunpack.c.l.b16 %v235
    %v614 = vunpack.c.h.b16 %v235
    %v615 = vunpack.c.l.b16 %v236
    %v616 = vunpack.c.h.b16 %v236
    %v617 = vunpack.c.l.b16 %v237
    %v618 = vunpack.c.h.b16 %v237
    %v619 = vunpack.c.l.b16 %v238
    %v620 = vunpack.c.h.b16 %v238
    %v621 = vunpack.c.l.b16 %v239
    %v622 = vunpack.c.h.b16 %v239
    %v623 = vunpack.c.l.b16 %v240
    %v624 = vunpack.c.h.b16 %v240
    %v625 = vunpack.c.l.b16 %v241
    %v626 = vunpack.c.h.b16 %v241
    %v627 = vunpack.c.l.b16 %v242
    %v628 = vunpack.c.h.b16 %v242
    %v629 = vunpack.c.l.b16 %v243
    %v630 = vunpack.c.h.b16 %v243
    %v631 = vunpack.c.l.b16 %v244
    %v632 = vunpack.c.h.b16 %v244
    %v633 = vunpack.c.l.b16 %v245
    %v634 = vunpack.c.h.b16 %v245
    %v635 = vunpack.c.l.b16 %v246
    %v636 = vunpack.c.h.b16 %v246
    %v637 = vunpack.c.l.b16 %v247
    %v638 = vunpack.c.h.b16 %v247
    %v639 = vunpack.c.l.b16 %v248
    %v640 = vunpack.c.h.b16 %v248
    %v641 = vunpack.c.l.b16 %v249
    %v642 = vunpack.c.h.b16 %v249
    %v643 = vunpack.c.l.b16 %v250
    %v644 = vunpack.c.h.b16 %v250
    %v645 = vpack.c.b16 %v393, %v389
    %v646 = vpack.c.b16 %v394, %v390
    %v647 = vpack.c.b16 %v395, %v391
    %v648 = vpack.c.b16 %v396, %v392
    %v649 = vpack.c.b16 %v401, %v397
    %v650 = vpack.c.b16 %v402, %v398
    %v651 = vpack.c.b16 %v403, %v399
    %v652 = vpack.c.b16 %v404, %v400
    %v653 = vpack.c.b16 %v409, %v405
    %v654 = vpack.c.b16 %v410, %v406
    %v655 = vpack.c.b16 %v411, %v407
    %v656 = vpack.c.b16 %v412, %v408
    %v657 = vpack.c.b16 %v417, %v413
    %v658 = vpack.c.b16 %v418, %v414
    %v659 = vpack.c.b16 %v419, %v415
    %v660 = vpack.c.b16 %v420, %v416
    %v661 = vpack.c.b16 %v425, %v421
    %v662 = vpack.c.b16 %v426, %v422
    %v663 = vpack.c.b16 %v427, %v423
    %v664 = vpack.c.b16 %v428, %v424
    %v665 = vpack.c.b16 %v433, %v429
    %v666 = vpack.c.b16 %v434, %v430
    %v667 = vpack.c.b16 %v435, %v431
    %v668 = vpack.c.b16 %v436, %v432
    %v669 = vpack.c.b16 %v441, %v437
    %v670 = vpack.c.b16 %v442, %v438
    %v671 = vpack.c.b16 %v443, %v439
    %v672 = vpack.c.b16 %v444, %v440
    %v673 = vpack.c.b16 %v449, %v445
    %v674 = vpack.c.b16 %v450, %v446
    %v675 = vpack.c.b16 %v451, %v447
    %v676 = vpack.c.b16 %v452, %v448
    %v677 = vpack.c.b16 %v457, %v453
    %v678 = vpack.c.b16 %v458, %v454
    %v679 = vpack.c.b16 %v459, %v455
    %v680 = vpack.c.b16 %v460, %v456
    %v681 = vpack.c.b16 %v465, %v461
    %v682 = vpack.c.b16 %v466, %v462
    %v683 = vpack.c.b16 %v467, %v463
    %v684 = vpack.c.b16 %v468, %v464
    %v685 = vpack.c.b16 %v473, %v469
    %v686 = vpack.c.b16 %v474, %v470
    %v687 = vpack.c.b16 %v475, %v471
    %v688 = vpack.c.b16 %v476, %v472
    %v689 = vpack.c.b16 %v481, %v477
    %v690 = vpack.c.b16 %v482, %v478
    %v691 = vpack.c.b16 %v483, %v479
    %v692 = vpack.c.b16 %v484, %v480
    %v693 = vpack.c.b16 %v489, %v485
    %v694 = vpack.c.b16 %v490, %v486
    %v695 = vpack.c.b16 %v491, %v487
    %v696 = vpack.c.b16 %v492, %v488
    %v697 = vpack.c.b16 %v497, %v493
    %v698 = vpack.c.b16 %v498, %v494
    %v699 = vpack.c.b16 %v499, %v495
    %v700 = vpack.c.b16 %v500, %v496
    %v701 = vpack.c.b16 %v505, %v501
    %v702 = vpack.c.b16 %v506, %v502
    %v703 = vpack.c.b16 %v507, %v503
    %v704 = vpack.c.b16 %v508, %v504
    %v705 = vpack.c.b16 %v513, %v509
    %v706 = vpack.c.b16 %v514, %v510
    %v707 = vpack.c.b16 %v515, %v511
    %v708 = vpack.c.b16 %v516, %v512
    %v709 = vpack.c.b16 %v521, %v517
    %v710 = vpack.c.b16 %v522, %v518
    %v711 = vpack.c.b16 %v523, %v519
    %v712 = vpack.c.b16 %v524, %v520
    %v713 = vpack.c.b16 %v529, %v525
    %v714 = vpack.c.b16 %v530, %v526
    %v715 = vpack.c.b16 %v531, %v527
    %v716 = vpack.c.b16 %v532, %v528
    %v717 = vpack.c.b16 %v537, %v533
    %v718 = vpack.c.b16 %v538, %v534
    %v719 = vpack.c.b16 %v539, %v535
    %v720 = vpack.c.b16 %v540, %v536
    %v721 = vpack.c.b16 %v545, %v541
    %v722 = vpack.c.b16 %v546, %v542
    %v723 = vpack.c.b16 %v547, %v543
    %v724 = vpack.c.b16 %v548, %v544
    %v725 = vpack.c.b16 %v553, %v549
    %v726 = vpack.c.b16 %v554, %v550
    %v727 = vpack.c.b16 %v555, %v551
    %v728 = vpack.c.b16 %v556, %v552
    %v729 = vpack.c.b16 %v561, %v557
    %v730 = vpack.c.b16 %v562, %v558
    %v731 = vpack.c.b16 %v563, %v559
    %v732 = vpack.c.b16 %v564, %v560
    %v733 = vpack.c.b16 %v569, %v565
    %v734 = vpack.c.b16 %v570, %v566
    %v735 = vpack.c.b16 %v571, %v567
    %v736 = vpack.c.b16 %v572, %v568
    %v737 = vpack.c.b16 %v577, %v573
    %v738 = vpack.c.b16 %v578, %v574
    %v739 = vpack.c.b16 %v579, %v575
    %v740 = vpack.c.b16 %v580, %v576
    %v741 = vpack.c.b16 %v585, %v581
    %v742 = vpack.c.b16 %v586, %v582
    %v743 = vpack.c.b16 %v587, %v583
    %v744 = vpack.c.b16 %v588, %v584
    %v745 = vpack.c.b16 %v593, %v589
    %v746 = vpack.c.b16 %v594, %v590
    %v747 = vpack.c.b16 %v595, %v591
    %v748 = vpack.c.b16 %v596, %v592
    %v749 = vpack.c.b16 %v601, %v597
    %v750 = vpack.c.b16 %v602, %v598
    %v751 = vpack.c.b16 %v603, %v599
    %v752 = vpack.c.b16 %v604, %v600
    %v753 = vpack.c.b16 %v609, %v605
    %v754 = vpack.c.b16 %v610, %v606
    %v755 = vpack.c.b16 %v611, %v607
    %v756 = vpack.c.b16 %v612, %v608
    %v757 = vpack.c.b16 %v617, %v613
    %v758 = vpack.c.b16 %v618, %v614
    %v759 = vpack.c.b16 %v619, %v615
    %v760 = vpack.c.b16 %v620, %v616
    %v761 = vpack.c.b16 %v625, %v621
    %v762 = vpack.c.b16 %v626, %v622
    %v763 = vpack.c.b16 %v627, %v623
    %v764 = vpack.c.b16 %v628, %v624
    %v765 = vpack.c.b16 %v633, %v629
    %v766 = vpack.c.b16 %v634, %v630
    %v767 = vpack.c.b16 %v635, %v631
    %v768 = vpack.c.b16 %v636, %v632
    %v769 = vpack.c.b16 %v641, %v637
    %v770 = vpack.c.b16 %v642, %v638
    %v771 = vpack.c.b16 %v643, %v639
    %v772 = vpack.c.b16 %v644, %v640
    %901 = vmatpush.bf16.msra.mxu0 %v673
    %902 = vmatpush.bf16.msra.mxu0 %v669
    %903 = vmatpush.bf16.msra.mxu0 %v665
    %904 = vmatpush.bf16.msra.mxu0 %v661
    %905 = vmatpush.bf16.msra.mxu0 %v657
    %906 = vmatpush.bf16.msra.mxu0 %v653
    %907 = vmatpush.bf16.msra.mxu0 %v649
    %908 = vmatpush.bf16.msra.mxu0 %v645
    %909 = vmatmul.bf16.gmra.mxu0 %v119
    %v910 = vpop.f32.mrf.mxu0
    %v911 = vadd.f32 %v253, %v910
    %v912 = vpop.f32.mrf.mxu0
    %913 = vdwg.mxu0
    %914 = vmatpush.bf16.msra.mxu0 %v705
    %915 = vmatpush.bf16.msra.mxu0 %v701
    %916 = vmatpush.bf16.msra.mxu0 %v697
    %917 = vmatpush.bf16.msra.mxu0 %v693
    %918 = vmatpush.bf16.msra.mxu0 %v689
    %919 = vmatpush.bf16.msra.mxu0 %v685
    %920 = vmatpush.bf16.msra.mxu0 %v681
    %921 = vmatpush.bf16.msra.mxu0 %v677
    %922 = vmatmul.bf16.gmra.mxu0 %v120
    %v923 = vpop.f32.mrf.mxu0
    %v924 = vadd.f32 %v911, %v923
    %v925 = vpop.f32.mrf.mxu0
    %926 = vdwg.mxu0
    %927 = vmatpush.bf16.msra.mxu0 %v737
    %928 = vmatpush.bf16.msra.mxu0 %v733
    %929 = vmatpush.bf16.msra.mxu0 %v729
    %930 = vmatpush.bf16.msra.mxu0 %v725
    %931 = vmatpush.bf16.msra.mxu0 %v721
    %932 = vmatpush.bf16.msra.mxu0 %v717
    %933 = vmatpush.bf16.msra.mxu0 %v713
    %934 = vmatpush.bf16.msra.mxu0 %v709
    %935 = vmatmul.bf16.gmra.mxu0 %v121
    %v936 = vpop.f32.mrf.mxu0
    %v937 = vadd.f32 %v924, %v936
    %v938 = vpop.f32.mrf.mxu0
    %939 = vdwg.mxu0
    %940 = vmatpush.bf16.msra.mxu0 %v769
    %941 = vmatpush.bf16.msra.mxu0 %v765
    %942 = vmatpush.bf16.msra.mxu0 %v761
    %943 = vmatpush.bf16.msra.mxu0 %v757
    %944 = vmatpush.bf16.msra.mxu0 %v753
    %945 = vmatpush.bf16.msra.mxu0 %v749
    %946 = vmatpush.bf16.msra.mxu0 %v745
    %947 = vmatpush.bf16.msra.mxu0 %v741
    %948 = vmatmul.bf16.gmra.mxu0 %v122
    %v949 = vpop.f32.mrf.mxu0
    %v950 = vadd.f32 %v937, %v949
    %v951 = vpop.f32.mrf.mxu0
    %952 = vdwg.mxu0
    %953 = vmatpush.bf16.msra.mxu0 %v674
    %954 = vmatpush.bf16.msra.mxu0 %v670
    %955 = vmatpush.bf16.msra.mxu0 %v666
    %956 = vmatpush.bf16.msra.mxu0 %v662
    %957 = vmatpush.bf16.msra.mxu0 %v658
    %958 = vmatpush.bf16.msra.mxu0 %v654
    %959 = vmatpush.bf16.msra.mxu0 %v650
    %960 = vmatpush.bf16.msra.mxu0 %v646
    %961 = vmatmul.bf16.gmra.mxu0 %v119
    %v962 = vpop.f32.mrf.mxu0
    %v963 = vadd.f32 %v254, %v962
    %v964 = vpop.f32.mrf.mxu0
    %965 = vdwg.mxu0
    %966 = vmatpush.bf16.msra.mxu0 %v706
    %967 = vmatpush.bf16.msra.mxu0 %v702
    %968 = vmatpush.bf16.msra.mxu0 %v698
    %969 = vmatpush.bf16.msra.mxu0 %v694
    %970 = vmatpush.bf16.msra.mxu0 %v690
    %971 = vmatpush.bf16.msra.mxu0 %v686
    %972 = vmatpush.bf16.msra.mxu0 %v682
    %973 = vmatpush.bf16.msra.mxu0 %v678
    %974 = vmatmul.bf16.gmra.mxu0 %v120
    %v975 = vpop.f32.mrf.mxu0
    %v976 = vadd.f32 %v963, %v975
    %v977 = vpop.f32.mrf.mxu0
    %978 = vdwg.mxu0
    %979 = vmatpush.bf16.msra.mxu0 %v738
    %980 = vmatpush.bf16.msra.mxu0 %v734
    %981 = vmatpush.bf16.msra.mxu0 %v730
    %982 = vmatpush.bf16.msra.mxu0 %v726
    %983 = vmatpush.bf16.msra.mxu0 %v722
    %984 = vmatpush.bf16.msra.mxu0 %v718
    %985 = vmatpush.bf16.msra.mxu0 %v714
    %986 = vmatpush.bf16.msra.mxu0 %v710
    %987 = vmatmul.bf16.gmra.mxu0 %v121
    %v988 = vpop.f32.mrf.mxu0
    %v989 = vadd.f32 %v976, %v988
    %v990 = vpop.f32.mrf.mxu0
    %991 = vdwg.mxu0
    %992 = vmatpush.bf16.msra.mxu0 %v770
    %993 = vmatpush.bf16.msra.mxu0 %v766
    %994 = vmatpush.bf16.msra.mxu0 %v762
    %995 = vmatpush.bf16.msra.mxu0 %v758
    %996 = vmatpush.bf16.msra.mxu0 %v754
    %997 = vmatpush.bf16.msra.mxu0 %v750
    %998 = vmatpush.bf16.msra.mxu0 %v746
    %999 = vmatpush.bf16.msra.mxu0 %v742
    %1000 = vmatmul.bf16.gmra.mxu0 %v122
    %v1001 = vpop.f32.mrf.mxu0
    %v1002 = vadd.f32 %v989, %v1001
    %v1003 = vpop.f32.mrf.mxu0
    %1004 = vdwg.mxu0
    %1005 = vmatpush.bf16.msra.mxu0 %v675
    %1006 = vmatpush.bf16.msra.mxu0 %v671
    %1007 = vmatpush.bf16.msra.mxu0 %v667
    %1008 = vmatpush.bf16.msra.mxu0 %v663
    %1009 = vmatpush.bf16.msra.mxu0 %v659
    %1010 = vmatpush.bf16.msra.mxu0 %v655
    %1011 = vmatpush.bf16.msra.mxu0 %v651
    %1012 = vmatpush.bf16.msra.mxu0 %v647
    %1013 = vmatmul.bf16.gmra.mxu0 %v119
    %v1014 = vpop.f32.mrf.mxu0
    %v1015 = vadd.f32 %v255, %v1014
    %v1016 = vpop.f32.mrf.mxu0
    %1017 = vdwg.mxu0
    %1018 = vmatpush.bf16.msra.mxu0 %v707
    %1019 = vmatpush.bf16.msra.mxu0 %v703
    %1020 = vmatpush.bf16.msra.mxu0 %v699
    %1021 = vmatpush.bf16.msra.mxu0 %v695
    %1022 = vmatpush.bf16.msra.mxu0 %v691
    %1023 = vmatpush.bf16.msra.mxu0 %v687
    %1024 = vmatpush.bf16.msra.mxu0 %v683
    %1025 = vmatpush.bf16.msra.mxu0 %v679
    %1026 = vmatmul.bf16.gmra.mxu0 %v120
    %v1027 = vpop.f32.mrf.mxu0
    %v1028 = vadd.f32 %v1015, %v1027
    %v1029 = vpop.f32.mrf.mxu0
    %1030 = vdwg.mxu0
    %1031 = vmatpush.bf16.msra.mxu0 %v739
    %1032 = vmatpush.bf16.msra.mxu0 %v735
    %1033 = vmatpush.bf16.msra.mxu0 %v731
    %1034 = vmatpush.bf16.msra.mxu0 %v727
    %1035 = vmatpush.bf16.msra.mxu0 %v723
    %1036 = vmatpush.bf16.msra.mxu0 %v719
    %1037 = vmatpush.bf16.msra.mxu0 %v715
    %1038 = vmatpush.bf16.msra.mxu0 %v711
    %1039 = vmatmul.bf16.gmra.mxu0 %v121
    %v1040 = vpop.f32.mrf.mxu0
    %v1041 = vadd.f32 %v1028, %v1040
    %v1042 = vpop.f32.mrf.mxu0
    %1043 = vdwg.mxu0
    %1044 = vmatpush.bf16.msra.mxu0 %v771
    %1045 = vmatpush.bf16.msra.mxu0 %v767
    %1046 = vmatpush.bf16.msra.mxu0 %v763
    %1047 = vmatpush.bf16.msra.mxu0 %v759
    %1048 = vmatpush.bf16.msra.mxu0 %v755
    %1049 = vmatpush.bf16.msra.mxu0 %v751
    %1050 = vmatpush.bf16.msra.mxu0 %v747
    %1051 = vmatpush.bf16.msra.mxu0 %v743
    %1052 = vmatmul.bf16.gmra.mxu0 %v122
    %v1053 = vpop.f32.mrf.mxu0
    %v1054 = vadd.f32 %v1041, %v1053
    %v1055 = vpop.f32.mrf.mxu0
    %1056 = vdwg.mxu0
    %1057 = vmatpush.bf16.msra.mxu0 %v676
    %1058 = vmatpush.bf16.msra.mxu0 %v672
    %1059 = vmatpush.bf16.msra.mxu0 %v668
    %1060 = vmatpush.bf16.msra.mxu0 %v664
    %1061 = vmatpush.bf16.msra.mxu0 %v660
    %1062 = vmatpush.bf16.msra.mxu0 %v656
    %1063 = vmatpush.bf16.msra.mxu0 %v652
    %1064 = vmatpush.bf16.msra.mxu0 %v648
    %1065 = vmatmul.bf16.gmra.mxu0 %v119
    %v1066 = vpop.f32.mrf.mxu0
    %v1067 = vadd.f32 %v256, %v1066
    %v1068 = vpop.f32.mrf.mxu0
    %1069 = vdwg.mxu0
    %1070 = vmatpush.bf16.msra.mxu0 %v708
    %1071 = vmatpush.bf16.msra.mxu0 %v704
    %1072 = vmatpush.bf16.msra.mxu0 %v700
    %1073 = vmatpush.bf16.msra.mxu0 %v696
    %1074 = vmatpush.bf16.msra.mxu0 %v692
    %1075 = vmatpush.bf16.msra.mxu0 %v688
    %1076 = vmatpush.bf16.msra.mxu0 %v684
    %1077 = vmatpush.bf16.msra.mxu0 %v680
    %1078 = vmatmul.bf16.gmra.mxu0 %v120
    %v1079 = vpop.f32.mrf.mxu0
    %v1080 = vadd.f32 %v1067, %v1079
    %v1081 = vpop.f32.mrf.mxu0
    %1082 = vdwg.mxu0
    %1083 = vmatpush.bf16.msra.mxu0 %v740
    %1084 = vmatpush.bf16.msra.mxu0 %v736
    %1085 = vmatpush.bf16.msra.mxu0 %v732
    %1086 = vmatpush.bf16.msra.mxu0 %v728
    %1087 = vmatpush.bf16.msra.mxu0 %v724
    %1088 = vmatpush.bf16.msra.mxu0 %v720
    %1089 = vmatpush.bf16.msra.mxu0 %v716
    %1090 = vmatpush.bf16.msra.mxu0 %v712
    %1091 = vmatmul.bf16.gmra.mxu0 %v121
    %v1092 = vpop.f32.mrf.mxu0
    %v1093 = vadd.f32 %v1080, %v1092
    %v1094 = vpop.f32.mrf.mxu0
    %1095 = vdwg.mxu0
    %1096 = vmatpush.bf16.msra.mxu0 %v772
    %1097 = vmatpush.bf16.msra.mxu0 %v768
    %1098 = vmatpush.bf16.msra.mxu0 %v764
    %1099 = vmatpush.bf16.msra.mxu0 %v760
    %1100 = vmatpush.bf16.msra.mxu0 %v756
    %1101 = vmatpush.bf16.msra.mxu0 %v752
    %1102 = vmatpush.bf16.msra.mxu0 %v748
    %1103 = vmatpush.bf16.msra.mxu0 %v744
    %1104 = vmatmul.bf16.gmra.mxu0 %v122
    %v1105 = vpop.f32.mrf.mxu0
    %v1106 = vadd.f32 %v1093, %v1105
    %v1107 = vpop.f32.mrf.mxu0
    %1108 = vdwg.mxu0
    %v1109 = vmax.f32 %v950, 0.0
    %v1110 = vmax.f32 %v1002, 0.0
    %v1111 = vmax.f32 %v1054, 0.0
    %v1112 = vmax.f32 %v1106, 0.0
    %v1113 = vpack.c.bf16 %v1109, %v1109
    %v1114 = vpack.c.bf16 %v1110, %v1110
    %v1115 = vpack.c.bf16 %v1111, %v1111
    %v1116 = vpack.c.bf16 %v1112, %v1112
    %v1117 = vld [vmem:[#allocation8] sm:$0xff]
    %v1118 = vld [vmem:[#allocation8 + $0x8] sm:$0xff]
    %v1119 = vld [vmem:[#allocation8 + $0x10] sm:$0xff]
    %v1120 = vld [vmem:[#allocation8 + $0x18] sm:$0xff]
    %v1121 = vld [vmem:[#allocation8 + $0x20] sm:$0xff]
    %v1122 = vld [vmem:[#allocation8 + $0x28] sm:$0xff]
    %v1123 = vld [vmem:[#allocation8 + $0x30] sm:$0xff]
    %v1124 = vld [vmem:[#allocation8 + $0x38] sm:$0xff]
    %v1125 = vld [vmem:[#allocation8 + $0x40] sm:$0xff]
    %v1126 = vld [vmem:[#allocation8 + $0x48] sm:$0xff]
    %v1127 = vld [vmem:[#allocation8 + $0x50] sm:$0xff]
    %v1128 = vld [vmem:[#allocation8 + $0x58] sm:$0xff]
    %v1129 = vld [vmem:[#allocation8 + $0x60] sm:$0xff]
    %v1130 = vld [vmem:[#allocation8 + $0x68] sm:$0xff]
    %v1131 = vld [vmem:[#allocation8 + $0x70] sm:$0xff]
    %v1132 = vld [vmem:[#allocation8 + $0x78] sm:$0xff]
    %v1133 = vld [vmem:[#allocation8 + $0x80] sm:$0xff]
    %v1134 = vld [vmem:[#allocation8 + $0x88] sm:$0xff]
    %v1135 = vld [vmem:[#allocation8 + $0x90] sm:$0xff]
    %v1136 = vld [vmem:[#allocation8 + $0x98] sm:$0xff]
    %v1137 = vld [vmem:[#allocation8 + $0xa0] sm:$0xff]
    %v1138 = vld [vmem:[#allocation8 + $0xa8] sm:$0xff]
    %v1139 = vld [vmem:[#allocation8 + $0xb0] sm:$0xff]
    %v1140 = vld [vmem:[#allocation8 + $0xb8] sm:$0xff]
    %v1141 = vld [vmem:[#allocation8 + $0xc0] sm:$0xff]
    %v1142 = vld [vmem:[#allocation8 + $0xc8] sm:$0xff]
    %v1143 = vld [vmem:[#allocation8 + $0xd0] sm:$0xff]
    %v1144 = vld [vmem:[#allocation8 + $0xd8] sm:$0xff]
    %v1145 = vld [vmem:[#allocation8 + $0xe0] sm:$0xff]
    %v1146 = vld [vmem:[#allocation8 + $0xe8] sm:$0xff]
    %v1147 = vld [vmem:[#allocation8 + $0xf0] sm:$0xff]
    %v1148 = vld [vmem:[#allocation8 + $0xf8] sm:$0xff]
    %v1149 = vld [vmem:[#allocation8 + $0x100] sm:$0xff]
    %v1150 = vld [vmem:[#allocation8 + $0x108] sm:$0xff]
    %v1151 = vld [vmem:[#allocation8 + $0x110] sm:$0xff]
    %v1152 = vld [vmem:[#allocation8 + $0x118] sm:$0xff]
    %v1153 = vld [vmem:[#allocation8 + $0x120] sm:$0xff]
    %v1154 = vld [vmem:[#allocation8 + $0x128] sm:$0xff]
    %v1155 = vld [vmem:[#allocation8 + $0x130] sm:$0xff]
    %v1156 = vld [vmem:[#allocation8 + $0x138] sm:$0xff]
    %v1157 = vld [vmem:[#allocation8 + $0x140] sm:$0xff]
    %v1158 = vld [vmem:[#allocation8 + $0x148] sm:$0xff]
    %v1159 = vld [vmem:[#allocation8 + $0x150] sm:$0xff]
    %v1160 = vld [vmem:[#allocation8 + $0x158] sm:$0xff]
    %v1161 = vld [vmem:[#allocation8 + $0x160] sm:$0xff]
    %v1162 = vld [vmem:[#allocation8 + $0x168] sm:$0xff]
    %v1163 = vld [vmem:[#allocation8 + $0x170] sm:$0xff]
    %v1164 = vld [vmem:[#allocation8 + $0x178] sm:$0xff]
    %v1165 = vld [vmem:[#allocation8 + $0x180] sm:$0xff]
    %v1166 = vld [vmem:[#allocation8 + $0x188] sm:$0xff]
    %v1167 = vld [vmem:[#allocation8 + $0x190] sm:$0xff]
    %v1168 = vld [vmem:[#allocation8 + $0x198] sm:$0xff]
    %v1169 = vld [vmem:[#allocation8 + $0x1a0] sm:$0xff]
    %v1170 = vld [vmem:[#allocation8 + $0x1a8] sm:$0xff]
    %v1171 = vld [vmem:[#allocation8 + $0x1b0] sm:$0xff]
    %v1172 = vld [vmem:[#allocation8 + $0x1b8] sm:$0xff]
    %v1173 = vld [vmem:[#allocation8 + $0x1c0] sm:$0xff]
    %v1174 = vld [vmem:[#allocation8 + $0x1c8] sm:$0xff]
    %v1175 = vld [vmem:[#allocation8 + $0x1d0] sm:$0xff]
    %v1176 = vld [vmem:[#allocation8 + $0x1d8] sm:$0xff]
    %v1177 = vld [vmem:[#allocation8 + $0x1e0] sm:$0xff]
    %v1178 = vld [vmem:[#allocation8 + $0x1e8] sm:$0xff]
    %v1179 = vld [vmem:[#allocation8 + $0x1f0] sm:$0xff]
    %v1180 = vld [vmem:[#allocation8 + $0x1f8] sm:$0xff]
    %v1181 = vld [vmem:[#allocation8 + $0x200] sm:$0xff]
    %v1182 = vld [vmem:[#allocation8 + $0x208] sm:$0xff]
    %v1183 = vld [vmem:[#allocation8 + $0x210] sm:$0xff]
    %v1184 = vld [vmem:[#allocation8 + $0x218] sm:$0xff]
    %v1185 = vld [vmem:[#allocation8 + $0x220] sm:$0xff]
    %v1186 = vld [vmem:[#allocation8 + $0x228] sm:$0xff]
    %v1187 = vld [vmem:[#allocation8 + $0x230] sm:$0xff]
    %v1188 = vld [vmem:[#allocation8 + $0x238] sm:$0xff]
    %v1189 = vld [vmem:[#allocation8 + $0x240] sm:$0xff]
    %v1190 = vld [vmem:[#allocation8 + $0x248] sm:$0xff]
    %v1191 = vld [vmem:[#allocation8 + $0x250] sm:$0xff]
    %v1192 = vld [vmem:[#allocation8 + $0x258] sm:$0xff]
    %v1193 = vld [vmem:[#allocation8 + $0x260] sm:$0xff]
    %v1194 = vld [vmem:[#allocation8 + $0x268] sm:$0xff]
    %v1195 = vld [vmem:[#allocation8 + $0x270] sm:$0xff]
    %v1196 = vld [vmem:[#allocation8 + $0x278] sm:$0xff]
    %v1197 = vld [vmem:[#allocation8 + $0x280] sm:$0xff]
    %v1198 = vld [vmem:[#allocation8 + $0x288] sm:$0xff]
    %v1199 = vld [vmem:[#allocation8 + $0x290] sm:$0xff]
    %v1200 = vld [vmem:[#allocation8 + $0x298] sm:$0xff]
    %v1201 = vld [vmem:[#allocation8 + $0x2a0] sm:$0xff]
    %v1202 = vld [vmem:[#allocation8 + $0x2a8] sm:$0xff]
    %v1203 = vld [vmem:[#allocation8 + $0x2b0] sm:$0xff]
    %v1204 = vld [vmem:[#allocation8 + $0x2b8] sm:$0xff]
    %v1205 = vld [vmem:[#allocation8 + $0x2c0] sm:$0xff]
    %v1206 = vld [vmem:[#allocation8 + $0x2c8] sm:$0xff]
    %v1207 = vld [vmem:[#allocation8 + $0x2d0] sm:$0xff]
    %v1208 = vld [vmem:[#allocation8 + $0x2d8] sm:$0xff]
    %v1209 = vld [vmem:[#allocation8 + $0x2e0] sm:$0xff]
    %v1210 = vld [vmem:[#allocation8 + $0x2e8] sm:$0xff]
    %v1211 = vld [vmem:[#allocation8 + $0x2f0] sm:$0xff]
    %v1212 = vld [vmem:[#allocation8 + $0x2f8] sm:$0xff]
    %v1213 = vld [vmem:[#allocation8 + $0x300] sm:$0xff]
    %v1214 = vld [vmem:[#allocation8 + $0x308] sm:$0xff]
    %v1215 = vld [vmem:[#allocation8 + $0x310] sm:$0xff]
    %v1216 = vld [vmem:[#allocation8 + $0x318] sm:$0xff]
    %v1217 = vld [vmem:[#allocation8 + $0x320] sm:$0xff]
    %v1218 = vld [vmem:[#allocation8 + $0x328] sm:$0xff]
    %v1219 = vld [vmem:[#allocation8 + $0x330] sm:$0xff]
    %v1220 = vld [vmem:[#allocation8 + $0x338] sm:$0xff]
    %v1221 = vld [vmem:[#allocation8 + $0x340] sm:$0xff]
    %v1222 = vld [vmem:[#allocation8 + $0x348] sm:$0xff]
    %v1223 = vld [vmem:[#allocation8 + $0x350] sm:$0xff]
    %v1224 = vld [vmem:[#allocation8 + $0x358] sm:$0xff]
    %v1225 = vld [vmem:[#allocation8 + $0x360] sm:$0xff]
    %v1226 = vld [vmem:[#allocation8 + $0x368] sm:$0xff]
    %v1227 = vld [vmem:[#allocation8 + $0x370] sm:$0xff]
    %v1228 = vld [vmem:[#allocation8 + $0x378] sm:$0xff]
    %v1229 = vld [vmem:[#allocation8 + $0x380] sm:$0xff]
    %v1230 = vld [vmem:[#allocation8 + $0x388] sm:$0xff]
    %v1231 = vld [vmem:[#allocation8 + $0x390] sm:$0xff]
    %v1232 = vld [vmem:[#allocation8 + $0x398] sm:$0xff]
    %v1233 = vld [vmem:[#allocation8 + $0x3a0] sm:$0xff]
    %v1234 = vld [vmem:[#allocation8 + $0x3a8] sm:$0xff]
    %v1235 = vld [vmem:[#allocation8 + $0x3b0] sm:$0xff]
    %v1236 = vld [vmem:[#allocation8 + $0x3b8] sm:$0xff]
    %v1237 = vld [vmem:[#allocation8 + $0x3c0] sm:$0xff]
    %v1238 = vld [vmem:[#allocation8 + $0x3c8] sm:$0xff]
    %v1239 = vld [vmem:[#allocation8 + $0x3d0] sm:$0xff]
    %v1240 = vld [vmem:[#allocation8 + $0x3d8] sm:$0xff]
    %v1241 = vld [vmem:[#allocation8 + $0x3e0] sm:$0xff]
    %v1242 = vld [vmem:[#allocation8 + $0x3e8] sm:$0xff]
    %v1243 = vld [vmem:[#allocation8 + $0x3f0] sm:$0xff]
    %v1244 = vld [vmem:[#allocation8 + $0x3f8] sm:$0xff]
    %v1245 = vld [vmem:[#allocation10] sm:$0xf]
    %v1247 = vperm.slane %v1245, 0
    %v1248 = vperm.slane %v1245, 1
    %v1249 = vperm.slane %v1245, 2
    %v1250 = vperm.slane %v1245, 3
    %v1383 = vunpack.c.l.b16 %v1117
    %v1384 = vunpack.c.h.b16 %v1117
    %v1385 = vunpack.c.l.b16 %v1118
    %v1386 = vunpack.c.h.b16 %v1118
    %v1387 = vunpack.c.l.b16 %v1119
    %v1388 = vunpack.c.h.b16 %v1119
    %v1389 = vunpack.c.l.b16 %v1120
    %v1390 = vunpack.c.h.b16 %v1120
    %v1391 = vunpack.c.l.b16 %v1121
    %v1392 = vunpack.c.h.b16 %v1121
    %v1393 = vunpack.c.l.b16 %v1122
    %v1394 = vunpack.c.h.b16 %v1122
    %v1395 = vunpack.c.l.b16 %v1123
    %v1396 = vunpack.c.h.b16 %v1123
    %v1397 = vunpack.c.l.b16 %v1124
    %v1398 = vunpack.c.h.b16 %v1124
    %v1399 = vunpack.c.l.b16 %v1125
    %v1400 = vunpack.c.h.b16 %v1125
    %v1401 = vunpack.c.l.b16 %v1126
    %v1402 = vunpack.c.h.b16 %v1126
    %v1403 = vunpack.c.l.b16 %v1127
    %v1404 = vunpack.c.h.b16 %v1127
    %v1405 = vunpack.c.l.b16 %v1128
    %v1406 = vunpack.c.h.b16 %v1128
    %v1407 = vunpack.c.l.b16 %v1129
    %v1408 = vunpack.c.h.b16 %v1129
    %v1409 = vunpack.c.l.b16 %v1130
    %v1410 = vunpack.c.h.b16 %v1130
    %v1411 = vunpack.c.l.b16 %v1131
    %v1412 = vunpack.c.h.b16 %v1131
    %v1413 = vunpack.c.l.b16 %v1132
    %v1414 = vunpack.c.h.b16 %v1132
    %v1415 = vunpack.c.l.b16 %v1133
    %v1416 = vunpack.c.h.b16 %v1133
    %v1417 = vunpack.c.l.b16 %v1134
    %v1418 = vunpack.c.h.b16 %v1134
    %v1419 = vunpack.c.l.b16 %v1135
    %v1420 = vunpack.c.h.b16 %v1135
    %v1421 = vunpack.c.l.b16 %v1136
    %v1422 = vunpack.c.h.b16 %v1136
    %v1423 = vunpack.c.l.b16 %v1137
    %v1424 = vunpack.c.h.b16 %v1137
    %v1425 = vunpack.c.l.b16 %v1138
    %v1426 = vunpack.c.h.b16 %v1138
    %v1427 = vunpack.c.l.b16 %v1139
    %v1428 = vunpack.c.h.b16 %v1139
    %v1429 = vunpack.c.l.b16 %v1140
    %v1430 = vunpack.c.h.b16 %v1140
    %v1431 = vunpack.c.l.b16 %v1141
    %v1432 = vunpack.c.h.b16 %v1141
    %v1433 = vunpack.c.l.b16 %v1142
    %v1434 = vunpack.c.h.b16 %v1142
    %v1435 = vunpack.c.l.b16 %v1143
    %v1436 = vunpack.c.h.b16 %v1143
    %v1437 = vunpack.c.l.b16 %v1144
    %v1438 = vunpack.c.h.b16 %v1144
    %v1439 = vunpack.c.l.b16 %v1145
    %v1440 = vunpack.c.h.b16 %v1145
    %v1441 = vunpack.c.l.b16 %v1146
    %v1442 = vunpack.c.h.b16 %v1146
    %v1443 = vunpack.c.l.b16 %v1147
    %v1444 = vunpack.c.h.b16 %v1147
    %v1445 = vunpack.c.l.b16 %v1148
    %v1446 = vunpack.c.h.b16 %v1148
    %v1447 = vunpack.c.l.b16 %v1149
    %v1448 = vunpack.c.h.b16 %v1149
    %v1449 = vunpack.c.l.b16 %v1150
    %v1450 = vunpack.c.h.b16 %v1150
    %v1451 = vunpack.c.l.b16 %v1151
    %v1452 = vunpack.c.h.b16 %v1151
    %v1453 = vunpack.c.l.b16 %v1152
    %v1454 = vunpack.c.h.b16 %v1152
    %v1455 = vunpack.c.l.b16 %v1153
    %v1456 = vunpack.c.h.b16 %v1153
    %v1457 = vunpack.c.l.b16 %v1154
    %v1458 = vunpack.c.h.b16 %v1154
    %v1459 = vunpack.c.l.b16 %v1155
    %v1460 = vunpack.c.h.b16 %v1155
    %v1461 = vunpack.c.l.b16 %v1156
    %v1462 = vunpack.c.h.b16 %v1156
    %v1463 = vunpack.c.l.b16 %v1157
    %v1464 = vunpack.c.h.b16 %v1157
    %v1465 = vunpack.c.l.b16 %v1158
    %v1466 = vunpack.c.h.b16 %v1158
    %v1467 = vunpack.c.l.b16 %v1159
    %v1468 = vunpack.c.h.b16 %v1159
    %v1469 = vunpack.c.l.b16 %v1160
    %v1470 = vunpack.c.h.b16 %v1160
    %v1471 = vunpack.c.l.b16 %v1161
    %v1472 = vunpack.c.h.b16 %v1161
    %v1473 = vunpack.c.l.b16 %v1162
    %v1474 = vunpack.c.h.b16 %v1162
    %v1475 = vunpack.c.l.b16 %v1163
    %v1476 = vunpack.c.h.b16 %v1163
    %v1477 = vunpack.c.l.b16 %v1164
    %v1478 = vunpack.c.h.b16 %v1164
    %v1479 = vunpack.c.l.b16 %v1165
    %v1480 = vunpack.c.h.b16 %v1165
    %v1481 = vunpack.c.l.b16 %v1166
    %v1482 = vunpack.c.h.b16 %v1166
    %v1483 = vunpack.c.l.b16 %v1167
    %v1484 = vunpack.c.h.b16 %v1167
    %v1485 = vunpack.c.l.b16 %v1168
    %v1486 = vunpack.c.h.b16 %v1168
    %v1487 = vunpack.c.l.b16 %v1169
    %v1488 = vunpack.c.h.b16 %v1169
    %v1489 = vunpack.c.l.b16 %v1170
    %v1490 = vunpack.c.h.b16 %v1170
    %v1491 = vunpack.c.l.b16 %v1171
    %v1492 = vunpack.c.h.b16 %v1171
    %v1493 = vunpack.c.l.b16 %v1172
    %v1494 = vunpack.c.h.b16 %v1172
    %v1495 = vunpack.c.l.b16 %v1173
    %v1496 = vunpack.c.h.b16 %v1173
    %v1497 = vunpack.c.l.b16 %v1174
    %v1498 = vunpack.c.h.b16 %v1174
    %v1499 = vunpack.c.l.b16 %v1175
    %v1500 = vunpack.c.h.b16 %v1175
    %v1501 = vunpack.c.l.b16 %v1176
    %v1502 = vunpack.c.h.b16 %v1176
    %v1503 = vunpack.c.l.b16 %v1177
    %v1504 = vunpack.c.h.b16 %v1177
    %v1505 = vunpack.c.l.b16 %v1178
    %v1506 = vunpack.c.h.b16 %v1178
    %v1507 = vunpack.c.l.b16 %v1179
    %v1508 = vunpack.c.h.b16 %v1179
    %v1509 = vunpack.c.l.b16 %v1180
    %v1510 = vunpack.c.h.b16 %v1180
    %v1511 = vunpack.c.l.b16 %v1181
    %v1512 = vunpack.c.h.b16 %v1181
    %v1513 = vunpack.c.l.b16 %v1182
    %v1514 = vunpack.c.h.b16 %v1182
    %v1515 = vunpack.c.l.b16 %v1183
    %v1516 = vunpack.c.h.b16 %v1183
    %v1517 = vunpack.c.l.b16 %v1184
    %v1518 = vunpack.c.h.b16 %v1184
    %v1519 = vunpack.c.l.b16 %v1185
    %v1520 = vunpack.c.h.b16 %v1185
    %v1521 = vunpack.c.l.b16 %v1186
    %v1522 = vunpack.c.h.b16 %v1186
    %v1523 = vunpack.c.l.b16 %v1187
    %v1524 = vunpack.c.h.b16 %v1187
    %v1525 = vunpack.c.l.b16 %v1188
    %v1526 = vunpack.c.h.b16 %v1188
    %v1527 = vunpack.c.l.b16 %v1189
    %v1528 = vunpack.c.h.b16 %v1189
    %v1529 = vunpack.c.l.b16 %v1190
    %v1530 = vunpack.c.h.b16 %v1190
    %v1531 = vunpack.c.l.b16 %v1191
    %v1532 = vunpack.c.h.b16 %v1191
    %v1533 = vunpack.c.l.b16 %v1192
    %v1534 = vunpack.c.h.b16 %v1192
    %v1535 = vunpack.c.l.b16 %v1193
    %v1536 = vunpack.c.h.b16 %v1193
    %v1537 = vunpack.c.l.b16 %v1194
    %v1538 = vunpack.c.h.b16 %v1194
    %v1539 = vunpack.c.l.b16 %v1195
    %v1540 = vunpack.c.h.b16 %v1195
    %v1541 = vunpack.c.l.b16 %v1196
    %v1542 = vunpack.c.h.b16 %v1196
    %v1543 = vunpack.c.l.b16 %v1197
    %v1544 = vunpack.c.h.b16 %v1197
    %v1545 = vunpack.c.l.b16 %v1198
    %v1546 = vunpack.c.h.b16 %v1198
    %v1547 = vunpack.c.l.b16 %v1199
    %v1548 = vunpack.c.h.b16 %v1199
    %v1549 = vunpack.c.l.b16 %v1200
    %v1550 = vunpack.c.h.b16 %v1200
    %v1551 = vunpack.c.l.b16 %v1201
    %v1552 = vunpack.c.h.b16 %v1201
    %v1553 = vunpack.c.l.b16 %v1202
    %v1554 = vunpack.c.h.b16 %v1202
    %v1555 = vunpack.c.l.b16 %v1203
    %v1556 = vunpack.c.h.b16 %v1203
    %v1557 = vunpack.c.l.b16 %v1204
    %v1558 = vunpack.c.h.b16 %v1204
    %v1559 = vunpack.c.l.b16 %v1205
    %v1560 = vunpack.c.h.b16 %v1205
    %v1561 = vunpack.c.l.b16 %v1206
    %v1562 = vunpack.c.h.b16 %v1206
    %v1563 = vunpack.c.l.b16 %v1207
    %v1564 = vunpack.c.h.b16 %v1207
    %v1565 = vunpack.c.l.b16 %v1208
    %v1566 = vunpack.c.h.b16 %v1208
    %v1567 = vunpack.c.l.b16 %v1209
    %v1568 = vunpack.c.h.b16 %v1209
    %v1569 = vunpack.c.l.b16 %v1210
    %v1570 = vunpack.c.h.b16 %v1210
    %v1571 = vunpack.c.l.b16 %v1211
    %v1572 = vunpack.c.h.b16 %v1211
    %v1573 = vunpack.c.l.b16 %v1212
    %v1574 = vunpack.c.h.b16 %v1212
    %v1575 = vunpack.c.l.b16 %v1213
    %v1576 = vunpack.c.h.b16 %v1213
    %v1577 = vunpack.c.l.b16 %v1214
    %v1578 = vunpack.c.h.b16 %v1214
    %v1579 = vunpack.c.l.b16 %v1215
    %v1580 = vunpack.c.h.b16 %v1215
    %v1581 = vunpack.c.l.b16 %v1216
    %v1582 = vunpack.c.h.b16 %v1216
    %v1583 = vunpack.c.l.b16 %v1217
    %v1584 = vunpack.c.h.b16 %v1217
    %v1585 = vunpack.c.l.b16 %v1218
    %v1586 = vunpack.c.h.b16 %v1218
    %v1587 = vunpack.c.l.b16 %v1219
    %v1588 = vunpack.c.h.b16 %v1219
    %v1589 = vunpack.c.l.b16 %v1220
    %v1590 = vunpack.c.h.b16 %v1220
    %v1591 = vunpack.c.l.b16 %v1221
    %v1592 = vunpack.c.h.b16 %v1221
    %v1593 = vunpack.c.l.b16 %v1222
    %v1594 = vunpack.c.h.b16 %v1222
    %v1595 = vunpack.c.l.b16 %v1223
    %v1596 = vunpack.c.h.b16 %v1223
    %v1597 = vunpack.c.l.b16 %v1224
    %v1598 = vunpack.c.h.b16 %v1224
    %v1599 = vunpack.c.l.b16 %v1225
    %v1600 = vunpack.c.h.b16 %v1225
    %v1601 = vunpack.c.l.b16 %v1226
    %v1602 = vunpack.c.h.b16 %v1226
    %v1603 = vunpack.c.l.b16 %v1227
    %v1604 = vunpack.c.h.b16 %v1227
    %v1605 = vunpack.c.l.b16 %v1228
    %v1606 = vunpack.c.h.b16 %v1228
    %v1607 = vunpack.c.l.b16 %v1229
    %v1608 = vunpack.c.h.b16 %v1229
    %v1609 = vunpack.c.l.b16 %v1230
    %v1610 = vunpack.c.h.b16 %v1230
    %v1611 = vunpack.c.l.b16 %v1231
    %v1612 = vunpack.c.h.b16 %v1231
    %v1613 = vunpack.c.l.b16 %v1232
    %v1614 = vunpack.c.h.b16 %v1232
    %v1615 = vunpack.c.l.b16 %v1233
    %v1616 = vunpack.c.h.b16 %v1233
    %v1617 = vunpack.c.l.b16 %v1234
    %v1618 = vunpack.c.h.b16 %v1234
    %v1619 = vunpack.c.l.b16 %v1235
    %v1620 = vunpack.c.h.b16 %v1235
    %v1621 = vunpack.c.l.b16 %v1236
    %v1622 = vunpack.c.h.b16 %v1236
    %v1623 = vunpack.c.l.b16 %v1237
    %v1624 = vunpack.c.h.b16 %v1237
    %v1625 = vunpack.c.l.b16 %v1238
    %v1626 = vunpack.c.h.b16 %v1238
    %v1627 = vunpack.c.l.b16 %v1239
    %v1628 = vunpack.c.h.b16 %v1239
    %v1629 = vunpack.c.l.b16 %v1240
    %v1630 = vunpack.c.h.b16 %v1240
    %v1631 = vunpack.c.l.b16 %v1241
    %v1632 = vunpack.c.h.b16 %v1241
    %v1633 = vunpack.c.l.b16 %v1242
    %v1634 = vunpack.c.h.b16 %v1242
    %v1635 = vunpack.c.l.b16 %v1243
    %v1636 = vunpack.c.h.b16 %v1243
    %v1637 = vunpack.c.l.b16 %v1244
    %v1638 = vunpack.c.h.b16 %v1244
    %v1639 = vpack.c.b16 %v1387, %v1383
    %v1640 = vpack.c.b16 %v1388, %v1384
    %v1641 = vpack.c.b16 %v1389, %v1385
    %v1642 = vpack.c.b16 %v1390, %v1386
    %v1643 = vpack.c.b16 %v1395, %v1391
    %v1644 = vpack.c.b16 %v1396, %v1392
    %v1645 = vpack.c.b16 %v1397, %v1393
    %v1646 = vpack.c.b16 %v1398, %v1394
    %v1647 = vpack.c.b16 %v1403, %v1399
    %v1648 = vpack.c.b16 %v1404, %v1400
    %v1649 = vpack.c.b16 %v1405, %v1401
    %v1650 = vpack.c.b16 %v1406, %v1402
    %v1651 = vpack.c.b16 %v1411, %v1407
    %v1652 = vpack.c.b16 %v1412, %v1408
    %v1653 = vpack.c.b16 %v1413, %v1409
    %v1654 = vpack.c.b16 %v1414, %v1410
    %v1655 = vpack.c.b16 %v1419, %v1415
    %v1656 = vpack.c.b16 %v1420, %v1416
    %v1657 = vpack.c.b16 %v1421, %v1417
    %v1658 = vpack.c.b16 %v1422, %v1418
    %v1659 = vpack.c.b16 %v1427, %v1423
    %v1660 = vpack.c.b16 %v1428, %v1424
    %v1661 = vpack.c.b16 %v1429, %v1425
    %v1662 = vpack.c.b16 %v1430, %v1426
    %v1663 = vpack.c.b16 %v1435, %v1431
    %v1664 = vpack.c.b16 %v1436, %v1432
    %v1665 = vpack.c.b16 %v1437, %v1433
    %v1666 = vpack.c.b16 %v1438, %v1434
    %v1667 = vpack.c.b16 %v1443, %v1439
    %v1668 = vpack.c.b16 %v1444, %v1440
    %v1669 = vpack.c.b16 %v1445, %v1441
    %v1670 = vpack.c.b16 %v1446, %v1442
    %v1671 = vpack.c.b16 %v1451, %v1447
    %v1672 = vpack.c.b16 %v1452, %v1448
    %v1673 = vpack.c.b16 %v1453, %v1449
    %v1674 = vpack.c.b16 %v1454, %v1450
    %v1675 = vpack.c.b16 %v1459, %v1455
    %v1676 = vpack.c.b16 %v1460, %v1456
    %v1677 = vpack.c.b16 %v1461, %v1457
    %v1678 = vpack.c.b16 %v1462, %v1458
    %v1679 = vpack.c.b16 %v1467, %v1463
    %v1680 = vpack.c.b16 %v1468, %v1464
    %v1681 = vpack.c.b16 %v1469, %v1465
    %v1682 = vpack.c.b16 %v1470, %v1466
    %v1683 = vpack.c.b16 %v1475, %v1471
    %v1684 = vpack.c.b16 %v1476, %v1472
    %v1685 = vpack.c.b16 %v1477, %v1473
    %v1686 = vpack.c.b16 %v1478, %v1474
    %v1687 = vpack.c.b16 %v1483, %v1479
    %v1688 = vpack.c.b16 %v1484, %v1480
    %v1689 = vpack.c.b16 %v1485, %v1481
    %v1690 = vpack.c.b16 %v1486, %v1482
    %v1691 = vpack.c.b16 %v1491, %v1487
    %v1692 = vpack.c.b16 %v1492, %v1488
    %v1693 = vpack.c.b16 %v1493, %v1489
    %v1694 = vpack.c.b16 %v1494, %v1490
    %v1695 = vpack.c.b16 %v1499, %v1495
    %v1696 = vpack.c.b16 %v1500, %v1496
    %v1697 = vpack.c.b16 %v1501, %v1497
    %v1698 = vpack.c.b16 %v1502, %v1498
    %v1699 = vpack.c.b16 %v1507, %v1503
    %v1700 = vpack.c.b16 %v1508, %v1504
    %v1701 = vpack.c.b16 %v1509, %v1505
    %v1702 = vpack.c.b16 %v1510, %v1506
    %v1703 = vpack.c.b16 %v1515, %v1511
    %v1704 = vpack.c.b16 %v1516, %v1512
    %v1705 = vpack.c.b16 %v1517, %v1513
    %v1706 = vpack.c.b16 %v1518, %v1514
    %v1707 = vpack.c.b16 %v1523, %v1519
    %v1708 = vpack.c.b16 %v1524, %v1520
    %v1709 = vpack.c.b16 %v1525, %v1521
    %v1710 = vpack.c.b16 %v1526, %v1522
    %v1711 = vpack.c.b16 %v1531, %v1527
    %v1712 = vpack.c.b16 %v1532, %v1528
    %v1713 = vpack.c.b16 %v1533, %v1529
    %v1714 = vpack.c.b16 %v1534, %v1530
    %v1715 = vpack.c.b16 %v1539, %v1535
    %v1716 = vpack.c.b16 %v1540, %v1536
    %v1717 = vpack.c.b16 %v1541, %v1537
    %v1718 = vpack.c.b16 %v1542, %v1538
    %v1719 = vpack.c.b16 %v1547, %v1543
    %v1720 = vpack.c.b16 %v1548, %v1544
    %v1721 = vpack.c.b16 %v1549, %v1545
    %v1722 = vpack.c.b16 %v1550, %v1546
    %v1723 = vpack.c.b16 %v1555, %v1551
    %v1724 = vpack.c.b16 %v1556, %v1552
    %v1725 = vpack.c.b16 %v1557, %v1553
    %v1726 = vpack.c.b16 %v1558, %v1554
    %v1727 = vpack.c.b16 %v1563, %v1559
    %v1728 = vpack.c.b16 %v1564, %v1560
    %v1729 = vpack.c.b16 %v1565, %v1561
    %v1730 = vpack.c.b16 %v1566, %v1562
    %v1731 = vpack.c.b16 %v1571, %v1567
    %v1732 = vpack.c.b16 %v1572, %v1568
    %v1733 = vpack.c.b16 %v1573, %v1569
    %v1734 = vpack.c.b16 %v1574, %v1570
    %v1735 = vpack.c.b16 %v1579, %v1575
    %v1736 = vpack.c.b16 %v1580, %v1576
    %v1737 = vpack.c.b16 %v1581, %v1577
    %v1738 = vpack.c.b16 %v1582, %v1578
    %v1739 = vpack.c.b16 %v1587, %v1583
    %v1740 = vpack.c.b16 %v1588, %v1584
    %v1741 = vpack.c.b16 %v1589, %v1585
    %v1742 = vpack.c.b16 %v1590, %v1586
    %v1743 = vpack.c.b16 %v1595, %v1591
    %v1744 = vpack.c.b16 %v1596, %v1592
    %v1745 = vpack.c.b16 %v1597, %v1593
    %v1746 = vpack.c.b16 %v1598, %v1594
    %v1747 = vpack.c.b16 %v1603, %v1599
    %v1748 = vpack.c.b16 %v1604, %v1600
    %v1749 = vpack.c.b16 %v1605, %v1601
    %v1750 = vpack.c.b16 %v1606, %v1602
    %v1751 = vpack.c.b16 %v1611, %v1607
    %v1752 = vpack.c.b16 %v1612, %v1608
    %v1753 = vpack.c.b16 %v1613, %v1609
    %v1754 = vpack.c.b16 %v1614, %v1610
    %v1755 = vpack.c.b16 %v1619, %v1615
    %v1756 = vpack.c.b16 %v1620, %v1616
    %v1757 = vpack.c.b16 %v1621, %v1617
    %v1758 = vpack.c.b16 %v1622, %v1618
    %v1759 = vpack.c.b16 %v1627, %v1623
    %v1760 = vpack.c.b16 %v1628, %v1624
    %v1761 = vpack.c.b16 %v1629, %v1625
    %v1762 = vpack.c.b16 %v1630, %v1626
    %v1763 = vpack.c.b16 %v1635, %v1631
    %v1764 = vpack.c.b16 %v1636, %v1632
    %v1765 = vpack.c.b16 %v1637, %v1633
    %v1766 = vpack.c.b16 %v1638, %v1634
    %1895 = vmatpush.bf16.msra.mxu0 %v1667
    %1896 = vmatpush.bf16.msra.mxu0 %v1663
    %1897 = vmatpush.bf16.msra.mxu0 %v1659
    %1898 = vmatpush.bf16.msra.mxu0 %v1655
    %1899 = vmatpush.bf16.msra.mxu0 %v1651
    %1900 = vmatpush.bf16.msra.mxu0 %v1647
    %1901 = vmatpush.bf16.msra.mxu0 %v1643
    %1902 = vmatpush.bf16.msra.mxu0 %v1639
    %1903 = vmatmul.bf16.gmra.mxu0 %v1113
    %v1904 = vpop.f32.mrf.mxu0
    %v1905 = vadd.f32 %v1247, %v1904
    %v1906 = vpop.f32.mrf.mxu0
    %1907 = vdwg.mxu0
    %1908 = vmatpush.bf16.msra.mxu0 %v1699
    %1909 = vmatpush.bf16.msra.mxu0 %v1695
    %1910 = vmatpush.bf16.msra.mxu0 %v1691
    %1911 = vmatpush.bf16.msra.mxu0 %v1687
    %1912 = vmatpush.bf16.msra.mxu0 %v1683
    %1913 = vmatpush.bf16.msra.mxu0 %v1679
    %1914 = vmatpush.bf16.msra.mxu0 %v1675
    %1915 = vmatpush.bf16.msra.mxu0 %v1671
    %1916 = vmatmul.bf16.gmra.mxu0 %v1114
    %v1917 = vpop.f32.mrf.mxu0
    %v1918 = vadd.f32 %v1905, %v1917
    %v1919 = vpop.f32.mrf.mxu0
    %1920 = vdwg.mxu0
    %1921 = vmatpush.bf16.msra.mxu0 %v1731
    %1922 = vmatpush.bf16.msra.mxu0 %v1727
    %1923 = vmatpush.bf16.msra.mxu0 %v1723
    %1924 = vmatpush.bf16.msra.mxu0 %v1719
    %1925 = vmatpush.bf16.msra.mxu0 %v1715
    %1926 = vmatpush.bf16.msra.mxu0 %v1711
    %1927 = vmatpush.bf16.msra.mxu0 %v1707
    %1928 = vmatpush.bf16.msra.mxu0 %v1703
    %1929 = vmatmul.bf16.gmra.mxu0 %v1115
    %v1930 = vpop.f32.mrf.mxu0
    %v1931 = vadd.f32 %v1918, %v1930
    %v1932 = vpop.f32.mrf.mxu0
    %1933 = vdwg.mxu0
    %1934 = vmatpush.bf16.msra.mxu0 %v1763
    %1935 = vmatpush.bf16.msra.mxu0 %v1759
    %1936 = vmatpush.bf16.msra.mxu0 %v1755
    %1937 = vmatpush.bf16.msra.mxu0 %v1751
    %1938 = vmatpush.bf16.msra.mxu0 %v1747
    %1939 = vmatpush.bf16.msra.mxu0 %v1743
    %1940 = vmatpush.bf16.msra.mxu0 %v1739
    %1941 = vmatpush.bf16.msra.mxu0 %v1735
    %1942 = vmatmul.bf16.gmra.mxu0 %v1116
    %v1943 = vpop.f32.mrf.mxu0
    %v1944 = vadd.f32 %v1931, %v1943
    %v1945 = vpop.f32.mrf.mxu0
    %1946 = vdwg.mxu0
    %1947 = vmatpush.bf16.msra.mxu0 %v1668
    %1948 = vmatpush.bf16.msra.mxu0 %v1664
    %1949 = vmatpush.bf16.msra.mxu0 %v1660
    %1950 = vmatpush.bf16.msra.mxu0 %v1656
    %1951 = vmatpush.bf16.msra.mxu0 %v1652
    %1952 = vmatpush.bf16.msra.mxu0 %v1648
    %1953 = vmatpush.bf16.msra.mxu0 %v1644
    %1954 = vmatpush.bf16.msra.mxu0 %v1640
    %1955 = vmatmul.bf16.gmra.mxu0 %v1113
    %v1956 = vpop.f32.mrf.mxu0
    %v1957 = vadd.f32 %v1248, %v1956
    %v1958 = vpop.f32.mrf.mxu0
    %1959 = vdwg.mxu0
    %1960 = vmatpush.bf16.msra.mxu0 %v1700
    %1961 = vmatpush.bf16.msra.mxu0 %v1696
    %1962 = vmatpush.bf16.msra.mxu0 %v1692
    %1963 = vmatpush.bf16.msra.mxu0 %v1688
    %1964 = vmatpush.bf16.msra.mxu0 %v1684
    %1965 = vmatpush.bf16.msra.mxu0 %v1680
    %1966 = vmatpush.bf16.msra.mxu0 %v1676
    %1967 = vmatpush.bf16.msra.mxu0 %v1672
    %1968 = vmatmul.bf16.gmra.mxu0 %v1114
    %v1969 = vpop.f32.mrf.mxu0
    %v1970 = vadd.f32 %v1957, %v1969
    %v1971 = vpop.f32.mrf.mxu0
    %1972 = vdwg.mxu0
    %1973 = vmatpush.bf16.msra.mxu0 %v1732
    %1974 = vmatpush.bf16.msra.mxu0 %v1728
    %1975 = vmatpush.bf16.msra.mxu0 %v1724
    %1976 = vmatpush.bf16.msra.mxu0 %v1720
    %1977 = vmatpush.bf16.msra.mxu0 %v1716
    %1978 = vmatpush.bf16.msra.mxu0 %v1712
    %1979 = vmatpush.bf16.msra.mxu0 %v1708
    %1980 = vmatpush.bf16.msra.mxu0 %v1704
    %1981 = vmatmul.bf16.gmra.mxu0 %v1115
    %v1982 = vpop.f32.mrf.mxu0
    %v1983 = vadd.f32 %v1970, %v1982
    %v1984 = vpop.f32.mrf.mxu0
    %1985 = vdwg.mxu0
    %1986 = vmatpush.bf16.msra.mxu0 %v1764
    %1987 = vmatpush.bf16.msra.mxu0 %v1760
    %1988 = vmatpush.bf16.msra.mxu0 %v1756
    %1989 = vmatpush.bf16.msra.mxu0 %v1752
    %1990 = vmatpush.bf16.msra.mxu0 %v1748
    %1991 = vmatpush.bf16.msra.mxu0 %v1744
    %1992 = vmatpush.bf16.msra.mxu0 %v1740
    %1993 = vmatpush.bf16.msra.mxu0 %v1736
    %1994 = vmatmul.bf16.gmra.mxu0 %v1116
    %v1995 = vpop.f32.mrf.mxu0
    %v1996 = vadd.f32 %v1983, %v1995
    %v1997 = vpop.f32.mrf.mxu0
    %1998 = vdwg.mxu0
    %1999 = vmatpush.bf16.msra.mxu0 %v1669
    %2000 = vmatpush.bf16.msra.mxu0 %v1665
    %2001 = vmatpush.bf16.msra.mxu0 %v1661
    %2002 = vmatpush.bf16.msra.mxu0 %v1657
    %2003 = vmatpush.bf16.msra.mxu0 %v1653
    %2004 = vmatpush.bf16.msra.mxu0 %v1649
    %2005 = vmatpush.bf16.msra.mxu0 %v1645
    %2006 = vmatpush.bf16.msra.mxu0 %v1641
    %2007 = vmatmul.bf16.gmra.mxu0 %v1113
    %v2008 = vpop.f32.mrf.mxu0
    %v2009 = vadd.f32 %v1249, %v2008
    %v2010 = vpop.f32.mrf.mxu0
    %2011 = vdwg.mxu0
    %2012 = vmatpush.bf16.msra.mxu0 %v1701
    %2013 = vmatpush.bf16.msra.mxu0 %v1697
    %2014 = vmatpush.bf16.msra.mxu0 %v1693
    %2015 = vmatpush.bf16.msra.mxu0 %v1689
    %2016 = vmatpush.bf16.msra.mxu0 %v1685
    %2017 = vmatpush.bf16.msra.mxu0 %v1681
    %2018 = vmatpush.bf16.msra.mxu0 %v1677
    %2019 = vmatpush.bf16.msra.mxu0 %v1673
    %2020 = vmatmul.bf16.gmra.mxu0 %v1114
    %v2021 = vpop.f32.mrf.mxu0
    %v2022 = vadd.f32 %v2009, %v2021
    %v2023 = vpop.f32.mrf.mxu0
    %2024 = vdwg.mxu0
    %2025 = vmatpush.bf16.msra.mxu0 %v1733
    %2026 = vmatpush.bf16.msra.mxu0 %v1729
    %2027 = vmatpush.bf16.msra.mxu0 %v1725
    %2028 = vmatpush.bf16.msra.mxu0 %v1721
    %2029 = vmatpush.bf16.msra.mxu0 %v1717
    %2030 = vmatpush.bf16.msra.mxu0 %v1713
    %2031 = vmatpush.bf16.msra.mxu0 %v1709
    %2032 = vmatpush.bf16.msra.mxu0 %v1705
    %2033 = vmatmul.bf16.gmra.mxu0 %v1115
    %v2034 = vpop.f32.mrf.mxu0
    %v2035 = vadd.f32 %v2022, %v2034
    %v2036 = vpop.f32.mrf.mxu0
    %2037 = vdwg.mxu0
    %2038 = vmatpush.bf16.msra.mxu0 %v1765
    %2039 = vmatpush.bf16.msra.mxu0 %v1761
    %2040 = vmatpush.bf16.msra.mxu0 %v1757
    %2041 = vmatpush.bf16.msra.mxu0 %v1753
    %2042 = vmatpush.bf16.msra.mxu0 %v1749
    %2043 = vmatpush.bf16.msra.mxu0 %v1745
    %2044 = vmatpush.bf16.msra.mxu0 %v1741
    %2045 = vmatpush.bf16.msra.mxu0 %v1737
    %2046 = vmatmul.bf16.gmra.mxu0 %v1116
    %v2047 = vpop.f32.mrf.mxu0
    %v2048 = vadd.f32 %v2035, %v2047
    %v2049 = vpop.f32.mrf.mxu0
    %2050 = vdwg.mxu0
    %2051 = vmatpush.bf16.msra.mxu0 %v1670
    %2052 = vmatpush.bf16.msra.mxu0 %v1666
    %2053 = vmatpush.bf16.msra.mxu0 %v1662
    %2054 = vmatpush.bf16.msra.mxu0 %v1658
    %2055 = vmatpush.bf16.msra.mxu0 %v1654
    %2056 = vmatpush.bf16.msra.mxu0 %v1650
    %2057 = vmatpush.bf16.msra.mxu0 %v1646
    %2058 = vmatpush.bf16.msra.mxu0 %v1642
    %2059 = vmatmul.bf16.gmra.mxu0 %v1113
    %v2060 = vpop.f32.mrf.mxu0
    %v2061 = vadd.f32 %v1250, %v2060
    %v2062 = vpop.f32.mrf.mxu0
    %2063 = vdwg.mxu0
    %2064 = vmatpush.bf16.msra.mxu0 %v1702
    %2065 = vmatpush.bf16.msra.mxu0 %v1698
    %2066 = vmatpush.bf16.msra.mxu0 %v1694
    %2067 = vmatpush.bf16.msra.mxu0 %v1690
    %2068 = vmatpush.bf16.msra.mxu0 %v1686
    %2069 = vmatpush.bf16.msra.mxu0 %v1682
    %2070 = vmatpush.bf16.msra.mxu0 %v1678
    %2071 = vmatpush.bf16.msra.mxu0 %v1674
    %2072 = vmatmul.bf16.gmra.mxu0 %v1114
    %v2073 = vpop.f32.mrf.mxu0
    %v2074 = vadd.f32 %v2061, %v2073
    %v2075 = vpop.f32.mrf.mxu0
    %2076 = vdwg.mxu0
    %2077 = vmatpush.bf16.msra.mxu0 %v1734
    %2078 = vmatpush.bf16.msra.mxu0 %v1730
    %2079 = vmatpush.bf16.msra.mxu0 %v1726
    %2080 = vmatpush.bf16.msra.mxu0 %v1722
    %2081 = vmatpush.bf16.msra.mxu0 %v1718
    %2082 = vmatpush.bf16.msra.mxu0 %v1714
    %2083 = vmatpush.bf16.msra.mxu0 %v1710
    %2084 = vmatpush.bf16.msra.mxu0 %v1706
    %2085 = vmatmul.bf16.gmra.mxu0 %v1115
    %v2086 = vpop.f32.mrf.mxu0
    %v2087 = vadd.f32 %v2074, %v2086
    %v2088 = vpop.f32.mrf.mxu0
    %2089 = vdwg.mxu0
    %2090 = vmatpush.bf16.msra.mxu0 %v1766
    %2091 = vmatpush.bf16.msra.mxu0 %v1762
    %2092 = vmatpush.bf16.msra.mxu0 %v1758
    %2093 = vmatpush.bf16.msra.mxu0 %v1754
    %2094 = vmatpush.bf16.msra.mxu0 %v1750
    %2095 = vmatpush.bf16.msra.mxu0 %v1746
    %2096 = vmatpush.bf16.msra.mxu0 %v1742
    %2097 = vmatpush.bf16.msra.mxu0 %v1738
    %2098 = vmatmul.bf16.gmra.mxu0 %v1116
    %v2099 = vpop.f32.mrf.mxu0
    %v2100 = vadd.f32 %v2087, %v2099
    %v2101 = vpop.f32.mrf.mxu0
    %2102 = vdwg.mxu0
    %v2103 = vmax.f32 %v1944, 0.0
    %v2104 = vmax.f32 %v1996, 0.0
    %v2105 = vmax.f32 %v2048, 0.0
    %v2106 = vmax.f32 %v2100, 0.0
    %v2107 = vpack.c.bf16 %v2103, %v2103
    %v2108 = vpack.c.bf16 %v2104, %v2104
    %v2109 = vpack.c.bf16 %v2105, %v2105
    %v2110 = vpack.c.bf16 %v2106, %v2106
    %v2111 = vld [vmem:[#allocation11] sm:$0xf]
    %v2112 = vld [vmem:[#allocation11 + $0x4] sm:$0xf]
    %v2113 = vld [vmem:[#allocation11 + $0x8] sm:$0xf]
    %v2114 = vld [vmem:[#allocation11 + $0xc] sm:$0xf]
    %v2115 = vld [vmem:[#allocation11 + $0x10] sm:$0xf]
    %v2116 = vld [vmem:[#allocation11 + $0x14] sm:$0xf]
    %v2117 = vld [vmem:[#allocation11 + $0x18] sm:$0xf]
    %v2118 = vld [vmem:[#allocation11 + $0x1c] sm:$0xf]
    %v2119 = vld [vmem:[#allocation11 + $0x20] sm:$0xf]
    %v2120 = vld [vmem:[#allocation11 + $0x24] sm:$0xf]
    %v2121 = vld [vmem:[#allocation11 + $0x28] sm:$0xf]
    %v2122 = vld [vmem:[#allocation11 + $0x2c] sm:$0xf]
    %v2123 = vld [vmem:[#allocation11 + $0x30] sm:$0xf]
    %v2124 = vld [vmem:[#allocation11 + $0x34] sm:$0xf]
    %v2125 = vld [vmem:[#allocation11 + $0x38] sm:$0xf]
    %v2126 = vld [vmem:[#allocation11 + $0x3c] sm:$0xf]
    %v2127 = vld [vmem:[#allocation11 + $0x40] sm:$0xf]
    %v2128 = vld [vmem:[#allocation11 + $0x44] sm:$0xf]
    %v2129 = vld [vmem:[#allocation11 + $0x48] sm:$0xf]
    %v2130 = vld [vmem:[#allocation11 + $0x4c] sm:$0xf]
    %v2131 = vld [vmem:[#allocation11 + $0x50] sm:$0xf]
    %v2132 = vld [vmem:[#allocation11 + $0x54] sm:$0xf]
    %v2133 = vld [vmem:[#allocation11 + $0x58] sm:$0xf]
    %v2134 = vld [vmem:[#allocation11 + $0x5c] sm:$0xf]
    %v2135 = vld [vmem:[#allocation11 + $0x60] sm:$0xf]
    %v2136 = vld [vmem:[#allocation11 + $0x64] sm:$0xf]
    %v2137 = vld [vmem:[#allocation11 + $0x68] sm:$0xf]
    %v2138 = vld [vmem:[#allocation11 + $0x6c] sm:$0xf]
    %v2139 = vld [vmem:[#allocation11 + $0x70] sm:$0xf]
    %v2140 = vld [vmem:[#allocation11 + $0x74] sm:$0xf]
    %v2141 = vld [vmem:[#allocation11 + $0x78] sm:$0xf]
    %v2142 = vld [vmem:[#allocation11 + $0x7c] sm:$0xf]
    %v2143 = vld [vmem:[#allocation11 + $0x80] sm:$0xf]
    %v2144 = vld [vmem:[#allocation11 + $0x84] sm:$0xf]
    %v2145 = vld [vmem:[#allocation11 + $0x88] sm:$0xf]
    %v2146 = vld [vmem:[#allocation11 + $0x8c] sm:$0xf]
    %v2147 = vld [vmem:[#allocation11 + $0x90] sm:$0xf]
    %v2148 = vld [vmem:[#allocation11 + $0x94] sm:$0xf]
    %v2149 = vld [vmem:[#allocation11 + $0x98] sm:$0xf]
    %v2150 = vld [vmem:[#allocation11 + $0x9c] sm:$0xf]
    %v2151 = vld [vmem:[#allocation11 + $0xa0] sm:$0xf]
    %v2152 = vld [vmem:[#allocation11 + $0xa4] sm:$0xf]
    %v2153 = vld [vmem:[#allocation11 + $0xa8] sm:$0xf]
    %v2154 = vld [vmem:[#allocation11 + $0xac] sm:$0xf]
    %v2155 = vld [vmem:[#allocation11 + $0xb0] sm:$0xf]
    %v2156 = vld [vmem:[#allocation11 + $0xb4] sm:$0xf]
    %v2157 = vld [vmem:[#allocation11 + $0xb8] sm:$0xf]
    %v2158 = vld [vmem:[#allocation11 + $0xbc] sm:$0xf]
    %v2159 = vld [vmem:[#allocation11 + $0xc0] sm:$0xf]
    %v2160 = vld [vmem:[#allocation11 + $0xc4] sm:$0xf]
    %v2161 = vld [vmem:[#allocation11 + $0xc8] sm:$0xf]
    %v2162 = vld [vmem:[#allocation11 + $0xcc] sm:$0xf]
    %v2163 = vld [vmem:[#allocation11 + $0xd0] sm:$0xf]
    %v2164 = vld [vmem:[#allocation11 + $0xd4] sm:$0xf]
    %v2165 = vld [vmem:[#allocation11 + $0xd8] sm:$0xf]
    %v2166 = vld [vmem:[#allocation11 + $0xdc] sm:$0xf]
    %v2167 = vld [vmem:[#allocation11 + $0xe0] sm:$0xf]
    %v2168 = vld [vmem:[#allocation11 + $0xe4] sm:$0xf]
    %v2169 = vld [vmem:[#allocation11 + $0xe8] sm:$0xf]
    %v2170 = vld [vmem:[#allocation11 + $0xec] sm:$0xf]
    %v2171 = vld [vmem:[#allocation11 + $0xf0] sm:$0xf]
    %v2172 = vld [vmem:[#allocation11 + $0xf4] sm:$0xf]
    %v2173 = vld [vmem:[#allocation11 + $0xf8] sm:$0xf]
    %v2174 = vld [vmem:[#allocation11 + $0xfc] sm:$0xf]
    %v2175 = vld [vmem:[%s6] sm:$0x1]
    %v2177 = vperm.slane %v2175, 0
    %v2243 = vunpack.c.l.b16 %v2111
    %v2244 = vunpack.c.l.b16 %v2112
    %v2245 = vunpack.c.l.b16 %v2113
    %v2246 = vunpack.c.l.b16 %v2114
    %v2247 = vunpack.c.l.b16 %v2115
    %v2248 = vunpack.c.l.b16 %v2116
    %v2249 = vunpack.c.l.b16 %v2117
    %v2250 = vunpack.c.l.b16 %v2118
    %v2251 = vunpack.c.l.b16 %v2119
    %v2252 = vunpack.c.l.b16 %v2120
    %v2253 = vunpack.c.l.b16 %v2121
    %v2254 = vunpack.c.l.b16 %v2122
    %v2255 = vunpack.c.l.b16 %v2123
    %v2256 = vunpack.c.l.b16 %v2124
    %v2257 = vunpack.c.l.b16 %v2125
    %v2258 = vunpack.c.l.b16 %v2126
    %v2259 = vunpack.c.l.b16 %v2127
    %v2260 = vunpack.c.l.b16 %v2128
    %v2261 = vunpack.c.l.b16 %v2129
    %v2262 = vunpack.c.l.b16 %v2130
    %v2263 = vunpack.c.l.b16 %v2131
    %v2264 = vunpack.c.l.b16 %v2132
    %v2265 = vunpack.c.l.b16 %v2133
    %v2266 = vunpack.c.l.b16 %v2134
    %v2267 = vunpack.c.l.b16 %v2135
    %v2268 = vunpack.c.l.b16 %v2136
    %v2269 = vunpack.c.l.b16 %v2137
    %v2270 = vunpack.c.l.b16 %v2138
    %v2271 = vunpack.c.l.b16 %v2139
    %v2272 = vunpack.c.l.b16 %v2140
    %v2273 = vunpack.c.l.b16 %v2141
    %v2274 = vunpack.c.l.b16 %v2142
    %v2275 = vunpack.c.l.b16 %v2143
    %v2276 = vunpack.c.l.b16 %v2144
    %v2277 = vunpack.c.l.b16 %v2145
    %v2278 = vunpack.c.l.b16 %v2146
    %v2279 = vunpack.c.l.b16 %v2147
    %v2280 = vunpack.c.l.b16 %v2148
    %v2281 = vunpack.c.l.b16 %v2149
    %v2282 = vunpack.c.l.b16 %v2150
    %v2283 = vunpack.c.l.b16 %v2151
    %v2284 = vunpack.c.l.b16 %v2152
    %v2285 = vunpack.c.l.b16 %v2153
    %v2286 = vunpack.c.l.b16 %v2154
    %v2287 = vunpack.c.l.b16 %v2155
    %v2288 = vunpack.c.l.b16 %v2156
    %v2289 = vunpack.c.l.b16 %v2157
    %v2290 = vunpack.c.l.b16 %v2158
    %v2291 = vunpack.c.l.b16 %v2159
    %v2292 = vunpack.c.l.b16 %v2160
    %v2293 = vunpack.c.l.b16 %v2161
    %v2294 = vunpack.c.l.b16 %v2162
    %v2295 = vunpack.c.l.b16 %v2163
    %v2296 = vunpack.c.l.b16 %v2164
    %v2297 = vunpack.c.l.b16 %v2165
    %v2298 = vunpack.c.l.b16 %v2166
    %v2299 = vunpack.c.l.b16 %v2167
    %v2300 = vunpack.c.l.b16 %v2168
    %v2301 = vunpack.c.l.b16 %v2169
    %v2302 = vunpack.c.l.b16 %v2170
    %v2303 = vunpack.c.l.b16 %v2171
    %v2304 = vunpack.c.l.b16 %v2172
    %v2305 = vunpack.c.l.b16 %v2173
    %v2306 = vunpack.c.l.b16 %v2174
    %v2307 = vpack.c.b16 %v2244, %v2243
    %v2308 = vpack.c.b16 %v2246, %v2245
    %v2309 = vpack.c.b16 %v2248, %v2247
    %v2310 = vpack.c.b16 %v2250, %v2249
    %v2311 = vpack.c.b16 %v2252, %v2251
    %v2312 = vpack.c.b16 %v2254, %v2253
    %v2313 = vpack.c.b16 %v2256, %v2255
    %v2314 = vpack.c.b16 %v2258, %v2257
    %v2315 = vpack.c.b16 %v2260, %v2259
    %v2316 = vpack.c.b16 %v2262, %v2261
    %v2317 = vpack.c.b16 %v2264, %v2263
    %v2318 = vpack.c.b16 %v2266, %v2265
    %v2319 = vpack.c.b16 %v2268, %v2267
    %v2320 = vpack.c.b16 %v2270, %v2269
    %v2321 = vpack.c.b16 %v2272, %v2271
    %v2322 = vpack.c.b16 %v2274, %v2273
    %v2323 = vpack.c.b16 %v2276, %v2275
    %v2324 = vpack.c.b16 %v2278, %v2277
    %v2325 = vpack.c.b16 %v2280, %v2279
    %v2326 = vpack.c.b16 %v2282, %v2281
    %v2327 = vpack.c.b16 %v2284, %v2283
    %v2328 = vpack.c.b16 %v2286, %v2285
    %v2329 = vpack.c.b16 %v2288, %v2287
    %v2330 = vpack.c.b16 %v2290, %v2289
    %v2331 = vpack.c.b16 %v2292, %v2291
    %v2332 = vpack.c.b16 %v2294, %v2293
    %v2333 = vpack.c.b16 %v2296, %v2295
    %v2334 = vpack.c.b16 %v2298, %v2297
    %v2335 = vpack.c.b16 %v2300, %v2299
    %v2336 = vpack.c.b16 %v2302, %v2301
    %v2337 = vpack.c.b16 %v2304, %v2303
    %v2338 = vpack.c.b16 %v2306, %v2305
    %2371 = vmatpush.bf16.msra.mxu0 %v2314
    %2372 = vmatpush.bf16.msra.mxu0 %v2313
    %2373 = vmatpush.bf16.msra.mxu0 %v2312
    %2374 = vmatpush.bf16.msra.mxu0 %v2311
    %2375 = vmatpush.bf16.msra.mxu0 %v2310
    %2376 = vmatpush.bf16.msra.mxu0 %v2309
    %2377 = vmatpush.bf16.msra.mxu0 %v2308
    %2378 = vmatpush.bf16.msra.mxu0 %v2307
    %2379 = vmatmul.bf16.gmra.mxu0 %v2107
    %v2380 = vpop.f32.mrf.mxu0
    %v2381 = vadd.f32 %v2177, %v2380
    %v2382 = vpop.f32.mrf.mxu0
    %2383 = vdwg.mxu0
    %2384 = vmatpush.bf16.msra.mxu0 %v2322
    %2385 = vmatpush.bf16.msra.mxu0 %v2321
    %2386 = vmatpush.bf16.msra.mxu0 %v2320
    %2387 = vmatpush.bf16.msra.mxu0 %v2319
    %2388 = vmatpush.bf16.msra.mxu0 %v2318
    %2389 = vmatpush.bf16.msra.mxu0 %v2317
    %2390 = vmatpush.bf16.msra.mxu0 %v2316
    %2391 = vmatpush.bf16.msra.mxu0 %v2315
    %2392 = vmatmul.bf16.gmra.mxu0 %v2108
    %v2393 = vpop.f32.mrf.mxu0
    %v2394 = vadd.f32 %v2381, %v2393
    %v2395 = vpop.f32.mrf.mxu0
    %2396 = vdwg.mxu0
    %2397 = vmatpush.bf16.msra.mxu0 %v2330
    %2398 = vmatpush.bf16.msra.mxu0 %v2329
    %2399 = vmatpush.bf16.msra.mxu0 %v2328
    %2400 = vmatpush.bf16.msra.mxu0 %v2327
    %2401 = vmatpush.bf16.msra.mxu0 %v2326
    %2402 = vmatpush.bf16.msra.mxu0 %v2325
    %2403 = vmatpush.bf16.msra.mxu0 %v2324
    %2404 = vmatpush.bf16.msra.mxu0 %v2323
    %2405 = vmatmul.bf16.gmra.mxu0 %v2109
    %v2406 = vpop.f32.mrf.mxu0
    %v2407 = vadd.f32 %v2394, %v2406
    %v2408 = vpop.f32.mrf.mxu0
    %2409 = vdwg.mxu0
    %2410 = vmatpush.bf16.msra.mxu0 %v2338
    %2411 = vmatpush.bf16.msra.mxu0 %v2337
    %2412 = vmatpush.bf16.msra.mxu0 %v2336
    %2413 = vmatpush.bf16.msra.mxu0 %v2335
    %2414 = vmatpush.bf16.msra.mxu0 %v2334
    %2415 = vmatpush.bf16.msra.mxu0 %v2333
    %2416 = vmatpush.bf16.msra.mxu0 %v2332
    %2417 = vmatpush.bf16.msra.mxu0 %v2331
    %2418 = vmatmul.bf16.gmra.mxu0 %v2110
    %v2419 = vpop.f32.mrf.mxu0
    %v2420 = vadd.f32 %v2407, %v2419
    %v2421 = vpop.f32.mrf.mxu0
    %2422 = vdwg.mxu0
    %v2423 = vpack.c.bf16 %v2420, %v2420
    %2424 = vst [vmem:[#allocation13] sm:$0xf] %v2423
    // Predicated region
    $region54: #{tpu_custom_call.1} parent=1 // pred_check
      _
    $region55: #{tpu_custom_call.1} parent=1 // pred_check_branch
      %2426 = sbr.rel (0) target = $region57
    $region56: #{tpu_custom_call.1} parent=1 // pred_region
      %2428 = vsyncadd [#allocation4], 0
      %s2430 = sshll.u32 [#allocation13], 4
      %s2431 = int_to_ptr.vmem [resolvable:$true] %s2430
      %s2432 = sshll.u32 %s7, 4
      %s2433 = int_to_ptr.hbm [resolvable:$true] %s2432
      %2435 = dma.vmem_to_hbm [thread:$0]  %s2431, 64, %s2433, [#allocation4]
    $region57: #{tpu_custom_call.1} parent=1 // pred_fallthru
      _
    // Predicated region
    $region58: #{tpu_custom_call.1} parent=1 // pred_check
      _
    $region59: #{tpu_custom_call.1} parent=1 // pred_check_branch
      %2437 = sbr.rel (0) target = $region61
    $region60: #{tpu_custom_call.1} parent=1 // pred_region
      %2439 = dma.done [#allocation4], 64
    $region61: #{tpu_custom_call.1} parent=1 // pred_fallthru
      _
    %2440 = vsyncpa [#allocation3], 1
    %2441 = vsyncpa [#allocation6], 1
    %2442 = vsyncpa [#allocation9], 1
    %2443 = vsyncpa [#allocation12], 1
    %2444 = vsyncpa [#allocation4], 1

</llo_original>
